<compile_context>
chip_gen: v5e
topology: v5e:2x2
jax: 0.10.0
libtpu: 0.0.40
codegen_flags: <defaults>
</compile_context>

<pallas_src>
import functools

import jax
import jax.numpy as jnp
from jax import lax
from jax.experimental import pallas as pl
from jax.experimental.pallas import tpu as pltpu

ZDIM = 32                # args.zdim
K = 128 * 7 * 7          # 6272 flattened conv-feature size


def sampler_kernel(x_ref, w_ref, b_ref, *rest, training):
    # x_ref:  (TB, K)      f32
    # w_ref:  (2*Z, K)     bf16   [z_mean weight ; z_var weight], native layout
    # b_ref:  (1, 2*Z)     f32    [z_mean bias   | z_var bias]
    # training: eps_ref (TB, Z) f32, then z/mean/logvar out refs (TB, Z) f32
    if training:
        eps_ref, z_ref, mean_ref, logvar_ref = rest
    else:
        z_ref, mean_ref, logvar_ref = rest

    x = x_ref[...].astype(jnp.bfloat16)
    # Fused matmul, contracting K on both operands (no weight transpose).
    mv = lax.dot_general(
        x, w_ref[...],
        dimension_numbers=(((1,), (1,)), ((), ())),
        preferred_element_type=jnp.float32,
    ) + b_ref[...]                                   # (TB, 2*Z) f32

    mean = mv[:, :ZDIM]
    logvar = mv[:, ZDIM:]

    mean_ref[...] = mean
    logvar_ref[...] = logvar

    if training:
        std = jnp.exp(0.5 * logvar)                  # logvar.mul(0.5).exp_()
        z_ref[...] = eps_ref[...] * std + mean       # eps.mul(std).add_(mean)
    else:
        z_ref[...] = mean


def prepare_params(w_mean, b_mean, w_var, b_var):
    """One-time weight prep (do at model init and cache; NOT per forward)."""
    w_cat = jnp.concatenate(
        [jnp.asarray(w_mean, jnp.float32), jnp.asarray(w_var, jnp.float32)],
        axis=0,
    ).astype(jnp.bfloat16)                                    # (2*Z, K) bf16
    b_cat = jnp.concatenate(
        [jnp.asarray(b_mean, jnp.float32), jnp.asarray(b_var, jnp.float32)]
    ).reshape(1, 2 * ZDIM)                                    # (1, 2*Z) f32
    return w_cat, b_cat


def sampler_forward(x_nchw, w_cat, b_cat, eps=None, *, training=True,
                    block_b=None):
    """x_nchw: (B, 128, 7, 7).  w_cat/b_cat from prepare_params().
    eps: (B, ZDIM) standard-normal noise (required iff training)."""
    B = x_nchw.shape[0]
    x2 = x_nchw.reshape(B, K).astype(jnp.float32)   # matches x.view(-1, 128*7*7)

    if block_b is None:
        # Single tile for small batches; 256-row tiles (multiple of 8, VMEM-safe
        # on v5e/v6e/v7x) with pipelined x DMAs for large batches.
        block_b = B if B <= 256 else 256
    grid = (pl.cdiv(B, block_b),)

    x_spec = pl.BlockSpec((block_b, K), lambda i: (i, 0))
    w_spec = pl.BlockSpec((2 * ZDIM, K), lambda i: (0, 0))    # VMEM-resident
    b_spec = pl.BlockSpec((1, 2 * ZDIM), lambda i: (0, 0))
    o_spec = pl.BlockSpec((block_b, ZDIM), lambda i: (i, 0))

    in_specs = [x_spec, w_spec, b_spec]
    args = [x2, w_cat, b_cat]
    if training:
        assert eps is not None, "eps noise required when training=True"
        in_specs.append(pl.BlockSpec((block_b, ZDIM), lambda i: (i, 0)))
        args.append(jnp.asarray(eps, jnp.float32))

    out_shape = tuple(
        jax.ShapeDtypeStruct((B, ZDIM), jnp.float32) for _ in range(3)
    )  # z, mean, logvar

    kernel = functools.partial(sampler_kernel, training=training)

    return pl.pallas_call(
        kernel,
        out_shape=out_shape,
        grid=grid,
        in_specs=in_specs,
        out_specs=[o_spec, o_spec, o_spec],
        compiler_params=pltpu.CompilerParams(
            dimension_semantics=("parallel",)),
    )(*args)


def _reference(x_nchw, w_mean, b_mean, w_var, b_var, eps, training=True,
               emulate_bf16=True):
    B = x_nchw.shape[0]
    x2 = x_nchw.reshape(B, K).astype(jnp.float32)
    wm = jnp.asarray(w_mean, jnp.float32)
    wv = jnp.asarray(w_var, jnp.float32)
    if emulate_bf16:
        x2 = x2.astype(jnp.bfloat16).astype(jnp.float32)
        wm = wm.astype(jnp.bfloat16).astype(jnp.float32)
        wv = wv.astype(jnp.bfloat16).astype(jnp.float32)
    hp = lax.Precision.HIGHEST
    mean = jnp.matmul(x2, wm.T, precision=hp) + b_mean
    logvar = jnp.matmul(x2, wv.T, precision=hp) + b_var
    z = eps * jnp.exp(0.5 * logvar) + mean if training else mean
    return z, mean, logvar


if __name__ == "__main__":
    key = jax.random.PRNGKey(0)
    kx, kwm, kbm, kwv, kbv, keps = jax.random.split(key, 6)

    B = 2
    x = jax.random.normal(kx, (B, 128, 7, 7), dtype=jnp.float32)

    # PyTorch Linear layout: (out_features, in_features).
    bound = 1.0 / jnp.sqrt(jnp.float32(K))
    w_mean = jax.random.uniform(kwm, (ZDIM, K), jnp.float32, -bound, bound)
    b_mean = jax.random.uniform(kbm, (ZDIM,), jnp.float32, -bound, bound)
    w_var = jax.random.uniform(kwv, (ZDIM, K), jnp.float32, -bound, bound)
    b_var = jax.random.uniform(kbv, (ZDIM,), jnp.float32, -bound, bound)

    # One-time prep (cached in a real model).
    w_cat, b_cat = prepare_params(w_mean, b_mean, w_var, b_var)

    # Reparameterization noise.
    eps = jax.random.normal(keps, (B, ZDIM), dtype=jnp.float32)

    # --- training path ---
    z, mean, logvar = sampler_forward(x, w_cat, b_cat, eps, training=True)
    jax.block_until_ready((z, mean, logvar))

    # Tight check vs a bf16-emulated f32 reference (same rounded operands).
    z_r, m_r, lv_r = _reference(x, w_mean, b_mean, w_var, b_var, eps,
                                training=True, emulate_bf16=True)
    assert jnp.allclose(mean, m_r, atol=2e-3, rtol=2e-3)
    assert jnp.allclose(logvar, lv_r, atol=2e-3, rtol=2e-3)
    assert jnp.allclose(z, z_r, atol=2e-3, rtol=2e-3)

    # Looser sanity check vs the pure-f32 PyTorch-equivalent math.
    z_f, m_f, lv_f = _reference(x, w_mean, b_mean, w_var, b_var, eps,
                                training=True, emulate_bf16=False)
    assert jnp.allclose(mean, m_f, atol=2e-2, rtol=2e-2)
    assert jnp.allclose(logvar, lv_f, atol=2e-2, rtol=2e-2)
    assert jnp.allclose(z, z_f, atol=2e-2, rtol=2e-2)

    # --- eval path (no eps DMA, z == mean) ---
    z_e, mean_e, logvar_e = sampler_forward(x, w_cat, b_cat, training=False)
    jax.block_until_ready((z_e, mean_e, logvar_e))
    assert jnp.allclose(z_e, mean_e)
    assert jnp.allclose(mean_e, mean, atol=1e-6, rtol=1e-6)

    print("KERNEL_OK")
</pallas_src>

<mosaic_0001>
module attributes {stable_mosaic.version = 11 : i64} {
  func.func @sampler_kernel(%arg0: i32, %arg1: memref<2x6272xf32, #tpu.memory_space<vmem>>, %arg2: memref<64x6272xbf16, #tpu.memory_space<vmem>>, %arg3: memref<1x64xf32, #tpu.memory_space<vmem>>, %arg4: memref<2x32xf32, #tpu.memory_space<vmem>>, %arg5: memref<2x32xf32, #tpu.memory_space<vmem>>, %arg6: memref<2x32xf32, #tpu.memory_space<vmem>>, %arg7: memref<2x32xf32, #tpu.memory_space<vmem>>) attributes {dimension_semantics = [#tpu.dimension_semantics<parallel>], iteration_bounds = array<i64: 1>, scalar_prefetch = 0 : i64, scratch_operands = 0 : i64, tpu.core_type = #tpu.core_type<tc>, window_params = [{transform_indices = @transform_0, window_bounds = array<i64: 2, 6272>}, {pipeline_mode = #tpu.pipeline_mode<synchronous>, transform_indices = @transform_1, window_bounds = array<i64: 64, 6272>}, {pipeline_mode = #tpu.pipeline_mode<synchronous>, transform_indices = @transform_2, window_bounds = array<i64: 1, 64>}, {transform_indices = @transform_3, window_bounds = array<i64: 2, 32>}, {transform_indices = @transform_4, window_bounds = array<i64: 2, 32>}, {transform_indices = @transform_5, window_bounds = array<i64: 2, 32>}, {transform_indices = @transform_6, window_bounds = array<i64: 2, 32>}]} {
    %c0 = arith.constant 0 : index
    %c0_0 = arith.constant 0 : index
    %0 = vector.load %arg1[%c0, %c0_0] : memref<2x6272xf32, #tpu.memory_space<vmem>>, vector<2x6272xf32>
    %1 = arith.truncf %0 : vector<2x6272xf32> to vector<2x6272xbf16>
    %c0_1 = arith.constant 0 : index
    %c0_2 = arith.constant 0 : index
    %2 = vector.load %arg2[%c0_1, %c0_2] : memref<64x6272xbf16, #tpu.memory_space<vmem>>, vector<64x6272xbf16>
    %cst = arith.constant dense<0.000000e+00> : vector<2x64xf32>
    %3 = tpu.matmul %1, %2, %cst {dimension_numbers = #tpu.dot_dimension_numbers<[1], [1], [0], [0], [0, 0, 1, 0], [], []>} : vector<2x6272xbf16>, vector<64x6272xbf16>, vector<2x64xf32> -> vector<2x64xf32>
    %c0_3 = arith.constant 0 : index
    %c0_4 = arith.constant 0 : index
    %4 = vector.load %arg3[%c0_3, %c0_4] : memref<1x64xf32, #tpu.memory_space<vmem>>, vector<1x64xf32>
    %5 = vector.broadcast %4 : vector<1x64xf32> to vector<2x64xf32>
    %6 = arith.addf %3, %5 : vector<2x64xf32>
    %7 = vector.extract_strided_slice %6 {offsets = [0, 0], sizes = [2, 32], strides = [1, 1]} : vector<2x64xf32> to vector<2x32xf32>
    %8 = vector.extract_strided_slice %6 {offsets = [0, 32], sizes = [2, 32], strides = [1, 1]} : vector<2x64xf32> to vector<2x32xf32>
    %c0_5 = arith.constant 0 : index
    %c0_6 = arith.constant 0 : index
    %9 = vector.load %arg6[%c0_5, %c0_6] : memref<2x32xf32, #tpu.memory_space<vmem>>, vector<2x32xf32>
    tpu.vector_store %arg6[%c0_5, %c0_6], %7 {strides = array<i32>} : memref<2x32xf32, #tpu.memory_space<vmem>>, vector<2x32xf32>,
    %c0_7 = arith.constant 0 : index
    %c0_8 = arith.constant 0 : index
    %10 = vector.load %arg7[%c0_7, %c0_8] : memref<2x32xf32, #tpu.memory_space<vmem>>, vector<2x32xf32>
    tpu.vector_store %arg7[%c0_7, %c0_8], %8 {strides = array<i32>} : memref<2x32xf32, #tpu.memory_space<vmem>>, vector<2x32xf32>,
    %cst_9 = arith.constant 5.000000e-01 : f32
    %11 = vector.broadcast %cst_9 : f32 to vector<2x32xf32>
    %12 = arith.mulf %11, %8 : vector<2x32xf32>
    %13 = math.exp %12 : vector<2x32xf32>
    %c0_10 = arith.constant 0 : index
    %c0_11 = arith.constant 0 : index
    %14 = vector.load %arg4[%c0_10, %c0_11] : memref<2x32xf32, #tpu.memory_space<vmem>>, vector<2x32xf32>
    %15 = arith.mulf %14, %13 : vector<2x32xf32>
    %16 = arith.addf %15, %7 : vector<2x32xf32>
    %c0_12 = arith.constant 0 : index
    %c0_13 = arith.constant 0 : index
    %17 = vector.load %arg5[%c0_12, %c0_13] : memref<2x32xf32, #tpu.memory_space<vmem>>, vector<2x32xf32>
    tpu.vector_store %arg5[%c0_12, %c0_13], %16 {strides = array<i32>} : memref<2x32xf32, #tpu.memory_space<vmem>>, vector<2x32xf32>,
    return
  }
  func.func @transform_0(%arg0: i32) -> (i32, i32) {
    %c0_i32 = arith.constant 0 : i32
    %c0_i32_0 = arith.constant 0 : i32
    return %arg0, %c0_i32 : i32, i32
  }
  func.func @transform_1(%arg0: i32) -> (i32, i32) {
    %c0_i32 = arith.constant 0 : i32
    %c0_i32_0 = arith.constant 0 : i32
    %c0_i32_1 = arith.constant 0 : i32
    return %c0_i32, %c0_i32_0 : i32, i32
  }
  func.func @transform_2(%arg0: i32) -> (i32, i32) {
    %c0_i32 = arith.constant 0 : i32
    %c0_i32_0 = arith.constant 0 : i32
    %c0_i32_1 = arith.constant 0 : i32
    return %c0_i32, %c0_i32_0 : i32, i32
  }
  func.func @transform_3(%arg0: i32) -> (i32, i32) {
    %c0_i32 = arith.constant 0 : i32
    %c0_i32_0 = arith.constant 0 : i32
    return %arg0, %c0_i32 : i32, i32
  }
  func.func @transform_4(%arg0: i32) -> (i32, i32) {
    %c0_i32 = arith.constant 0 : i32
    %c0_i32_0 = arith.constant 0 : i32
    return %arg0, %c0_i32 : i32, i32
  }
  func.func @transform_5(%arg0: i32) -> (i32, i32) {
    %c0_i32 = arith.constant 0 : i32
    %c0_i32_0 = arith.constant 0 : i32
    return %arg0, %c0_i32 : i32, i32
  }
  func.func @transform_6(%arg0: i32) -> (i32, i32) {
    %c0_i32 = arith.constant 0 : i32
    %c0_i32_0 = arith.constant 0 : i32
    return %arg0, %c0_i32 : i32, i32
  }
}

</mosaic_0001>

<llo_original>
// kernel: tpu_custom_call.1
$region0: #{tpu_custom_call.1}
  #allocation0 [shape = 'u32[]', space=smem, size = 0x4, offset = 0x4, fixed_abs, tag = 'smem constant byte address 0x4 - core index']
  #allocation1 [shape = 'u32[72,128]{1,0:T(1,128)}', space=vmem, size = 0x9000, scoped, tag = 'internal scratch']
  %s0 = inlined_call_operand.hbm [shape: f32[2,6272], index: 0, kind: input, shape index: {}]
  %s1 = inlined_call_operand.hbm [shape: bf16[64,6272], index: 1, kind: input, shape index: {}]
  %s2 = inlined_call_operand.hbm [shape: f32[1,64], index: 2, kind: input, shape index: {}]
  %s3 = inlined_call_operand.vmem [shape: f32[2,32], index: 3, kind: input, shape index: {}]
  %s4 = inlined_call_operand.hbm [shape: f32[2,32], index: 4, kind: output, shape index: {0}]
  %s5 = inlined_call_operand.hbm [shape: f32[2,32], index: 5, kind: output, shape index: {1}]
  %s6 = inlined_call_operand.hbm [shape: f32[2,32], index: 6, kind: output, shape index: {2}]
  %7 = xla_tuple %s4, %s5, %s6
  %s8 = sld [smem:[#allocation0]]
  $region54: #{tpu_custom_call.1} parent=0
    _
  %s10 = ssub.s32 1, %s8
  %s11 = scalar_select 0, %s10, %s8
  $region1: #{tpu_custom_call.1} parent=0
    #allocation2 [shape = 'u8[50176]{0}', space=vmem, size = 0xc400, scoped, tag = 'input window, operand 0, single buffered']
    #allocation3 [shape = 's32[1]{0}', space=sflag, size = 0x4, scoped, tag = 'scoped memory for tpu_custom_call.1']
    #allocation4 [shape = 's32[1]{0}', space=sflag, size = 0x4, scoped, tag = 'scoped memory for tpu_custom_call.1']
    #allocation5 [shape = 'u8[802816]{0}', space=vmem, size = 0xc4000, scoped, tag = 'input window, operand 1, single buffered']
    #allocation6 [shape = 's32[1]{0}', space=sflag, size = 0x4, scoped, tag = 'scoped memory for tpu_custom_call.1']
    #allocation7 [shape = 'u8[512]{0}', space=vmem, size = 0x400, scoped, tag = 'input window, operand 2, single buffered']
    #allocation8 [shape = 'u8[1024]{0}', space=vmem, size = 0x400, scoped, tag = 'output window, operand 0, single buffered']
    #allocation9 [shape = 'u8[1024]{0}', space=vmem, size = 0x400, scoped, tag = 'output window, operand 1, single buffered']
    #allocation10 [shape = 's32[1]{0}', space=sflag, size = 0x4, scoped, tag = 'scoped memory for tpu_custom_call.1']
    #allocation11 [shape = 'u8[1024]{0}', space=vmem, size = 0x400, scoped, tag = 'output window, operand 2, single buffered']
    %12 = vsyncpa [#allocation3], 0
    %13 = vsyncpa [#allocation6], 0
    %14 = vsyncpa [#allocation4], 0
    %15 = vsyncpa [#allocation10], 0
    // Predicated region
    $region2: #{tpu_custom_call.1} parent=1 // pred_check
      _
    $region3: #{tpu_custom_call.1} parent=1 // pred_check_branch
      %17 = sbr.rel (0) target = $region5
    $region4: #{tpu_custom_call.1} parent=1 // pred_region
      %19 = vsyncadd [#allocation3], 0
      %s21 = sshll.u32 %s0, 4
      %s22 = int_to_ptr.hbm [resolvable:$true] %s21
      %s23 = sshll.u32 [#allocation2], 4
      %s24 = int_to_ptr.vmem [resolvable:$true] %s23
      %26 = dma.hbm_to_vmem [thread:$0]  %s22, 1568, %s24, [#allocation3]
    $region5: #{tpu_custom_call.1} parent=1 // pred_fallthru
      _
    // Predicated region
    $region6: #{tpu_custom_call.1} parent=1 // pred_check
      _
    $region7: #{tpu_custom_call.1} parent=1 // pred_check_branch
      %28 = sbr.rel (0) target = $region9
    $region8: #{tpu_custom_call.1} parent=1 // pred_region
      %30 = vsyncadd [#allocation6], 0
      %s31 = sshll.u32 %s1, 4
      %s32 = int_to_ptr.hbm [resolvable:$true] %s31
      %s33 = sshll.u32 [#allocation5], 4
      %s34 = int_to_ptr.vmem [resolvable:$true] %s33
      %39 = dma.hbm_to_vmem [thread:$0]  %s32, 25088, %s34, [#allocation6], 3136, 3136, 196
    $region9: #{tpu_custom_call.1} parent=1 // pred_fallthru
      _
    // Predicated region
    $region10: #{tpu_custom_call.1} parent=1 // pred_check
      _
    $region11: #{tpu_custom_call.1} parent=1 // pred_check_branch
      %41 = sbr.rel (0) target = $region13
    $region12: #{tpu_custom_call.1} parent=1 // pred_region
      %43 = vsyncadd [#allocation6], 0
      %s45 = sshll.u32 %s2, 4
      %s46 = int_to_ptr.hbm [resolvable:$true] %s45
      %s47 = sshll.u32 [#allocation7], 4
      %s48 = int_to_ptr.vmem [resolvable:$true] %s47
      %50 = dma.hbm_to_vmem [thread:$0]  %s46, 16, %s48, [#allocation6]
    $region13: #{tpu_custom_call.1} parent=1 // pred_fallthru
      _
    // Predicated region
    $region14: #{tpu_custom_call.1} parent=1 // pred_check
      _
    $region15: #{tpu_custom_call.1} parent=1 // pred_check_branch
      %52 = sbr.rel (0) target = $region17
    $region16: #{tpu_custom_call.1} parent=1 // pred_region
      _
    $region17: #{tpu_custom_call.1} parent=1 // pred_fallthru
      _
    // Predicated region
    $region18: #{tpu_custom_call.1} parent=1 // pred_check
      _
    $region19: #{tpu_custom_call.1} parent=1 // pred_check_branch
      %54 = sbr.rel (0) target = $region21
    $region20: #{tpu_custom_call.1} parent=1 // pred_region
      %56 = dma.done [#allocation3], 1568
    $region21: #{tpu_custom_call.1} parent=1 // pred_fallthru
      _
    // Predicated region
    $region22: #{tpu_custom_call.1} parent=1 // pred_check
      _
    $region23: #{tpu_custom_call.1} parent=1 // pred_check_branch
      %58 = sbr.rel (0) target = $region25
    $region24: #{tpu_custom_call.1} parent=1 // pred_region
      %60 = dma.done [#allocation6], 25088
    $region25: #{tpu_custom_call.1} parent=1 // pred_fallthru
      _
    // Predicated region
    $region26: #{tpu_custom_call.1} parent=1 // pred_check
      _
    $region27: #{tpu_custom_call.1} parent=1 // pred_check_branch
      %62 = sbr.rel (0) target = $region29
    $region28: #{tpu_custom_call.1} parent=1 // pred_region
      %64 = dma.done [#allocation6], 16
    $region29: #{tpu_custom_call.1} parent=1 // pred_fallthru
      _
    %v66 = vld [vmem:[#allocation2] sm:$0xff]
    %v67 = vld [vmem:[#allocation2 + $0x8] sm:$0xff]
    %v68 = vld [vmem:[#allocation2 + $0x10] sm:$0xff]
    %v69 = vld [vmem:[#allocation2 + $0x18] sm:$0xff]
    %v70 = vld [vmem:[#allocation2 + $0x20] sm:$0xff]
    %v71 = vld [vmem:[#allocation2 + $0x28] sm:$0xff]
    %v72 = vld [vmem:[#allocation2 + $0x30] sm:$0xff]
    %v73 = vld [vmem:[#allocation2 + $0x38] sm:$0xff]
    %v74 = vld [vmem:[#allocation2 + $0x40] sm:$0xff]
    %v75 = vld [vmem:[#allocation2 + $0x48] sm:$0xff]
    %v76 = vld [vmem:[#allocation2 + $0x50] sm:$0xff]
    %v77 = vld [vmem:[#allocation2 + $0x58] sm:$0xff]
    %v78 = vld [vmem:[#allocation2 + $0x60] sm:$0x3]
    %92 = vst [vmem:[#allocation1] ss:$4 sm:$0xff] %v66
    %s93 = scalar_lea.vmem [#allocation1], 32
    %94 = vst [vmem:[%s93] ss:$4 sm:$0xff] %v67
    %v95 = vld.sshfl [vmem:[#allocation1] sm:$0xff pattern:$0x73625140]
    %v96 = vld.sshfl [vmem:[#allocation1 + $0x8] sm:$0xff pattern:$0x73625140]
    %v97 = vld.sshfl [vmem:[#allocation1 + $0x10] sm:$0xff pattern:$0x73625140]
    %v98 = vld.sshfl [vmem:[#allocation1 + $0x18] sm:$0xff pattern:$0x73625140]
    %v99 = vld.sshfl [vmem:[#allocation1 + $0x20] sm:$0xff pattern:$0x73625140]
    %v100 = vld.sshfl [vmem:[#allocation1 + $0x28] sm:$0xff pattern:$0x73625140]
    %v101 = vld.sshfl [vmem:[#allocation1 + $0x30] sm:$0xff pattern:$0x73625140]
    %v102 = vld.sshfl [vmem:[#allocation1 + $0x38] sm:$0xff pattern:$0x73625140]
    %103 = vst [vmem:[#allocation1] ss:$4 sm:$0xff] %v68
    %104 = vst [vmem:[%s93] ss:$4 sm:$0xff] %v69
    %v105 = vld.sshfl [vmem:[#allocation1] sm:$0xff pattern:$0x73625140]
    %v106 = vld.sshfl [vmem:[#allocation1 + $0x8] sm:$0xff pattern:$0x73625140]
    %v107 = vld.sshfl [vmem:[#allocation1 + $0x10] sm:$0xff pattern:$0x73625140]
    %v108 = vld.sshfl [vmem:[#allocation1 + $0x18] sm:$0xff pattern:$0x73625140]
    %v109 = vld.sshfl [vmem:[#allocation1 + $0x20] sm:$0xff pattern:$0x73625140]
    %v110 = vld.sshfl [vmem:[#allocation1 + $0x28] sm:$0xff pattern:$0x73625140]
    %v111 = vld.sshfl [vmem:[#allocation1 + $0x30] sm:$0xff pattern:$0x73625140]
    %v112 = vld.sshfl [vmem:[#allocation1 + $0x38] sm:$0xff pattern:$0x73625140]
    %113 = vst [vmem:[#allocation1] ss:$4 sm:$0xff] %v70
    %114 = vst [vmem:[%s93] ss:$4 sm:$0xff] %v71
    %v115 = vld.sshfl [vmem:[#allocation1] sm:$0xff pattern:$0x73625140]
    %v116 = vld.sshfl [vmem:[#allocation1 + $0x8] sm:$0xff pattern:$0x73625140]
    %v117 = vld.sshfl [vmem:[#allocation1 + $0x10] sm:$0xff pattern:$0x73625140]
    %v118 = vld.sshfl [vmem:[#allocation1 + $0x18] sm:$0xff pattern:$0x73625140]
    %v119 = vld.sshfl [vmem:[#allocation1 + $0x20] sm:$0xff pattern:$0x73625140]
    %v120 = vld.sshfl [vmem:[#allocation1 + $0x28] sm:$0xff pattern:$0x73625140]
    %v121 = vld.sshfl [vmem:[#allocation1 + $0x30] sm:$0xff pattern:$0x73625140]
    %v122 = vld.sshfl [vmem:[#allocation1 + $0x38] sm:$0xff pattern:$0x73625140]
    %123 = vst [vmem:[#allocation1] ss:$4 sm:$0xff] %v72
    %124 = vst [vmem:[%s93] ss:$4 sm:$0xff] %v73
    %v125 = vld.sshfl [vmem:[#allocation1] sm:$0xff pattern:$0x73625140]
    %v126 = vld.sshfl [vmem:[#allocation1 + $0x8] sm:$0xff pattern:$0x73625140]
    %v127 = vld.sshfl [vmem:[#allocation1 + $0x10] sm:$0xff pattern:$0x73625140]
    %v128 = vld.sshfl [vmem:[#allocation1 + $0x18] sm:$0xff pattern:$0x73625140]
    %v129 = vld.sshfl [vmem:[#allocation1 + $0x20] sm:$0xff pattern:$0x73625140]
    %v130 = vld.sshfl [vmem:[#allocation1 + $0x28] sm:$0xff pattern:$0x73625140]
    %v131 = vld.sshfl [vmem:[#allocation1 + $0x30] sm:$0xff pattern:$0x73625140]
    %v132 = vld.sshfl [vmem:[#allocation1 + $0x38] sm:$0xff pattern:$0x73625140]
    %133 = vst [vmem:[#allocation1] ss:$4 sm:$0xff] %v74
    %134 = vst [vmem:[%s93] ss:$4 sm:$0xff] %v75
    %v135 = vld.sshfl [vmem:[#allocation1] sm:$0xff pattern:$0x73625140]
    %v136 = vld.sshfl [vmem:[#allocation1 + $0x8] sm:$0xff pattern:$0x73625140]
    %v137 = vld.sshfl [vmem:[#allocation1 + $0x10] sm:$0xff pattern:$0x73625140]
    %v138 = vld.sshfl [vmem:[#allocation1 + $0x18] sm:$0xff pattern:$0x73625140]
    %v139 = vld.sshfl [vmem:[#allocation1 + $0x20] sm:$0xff pattern:$0x73625140]
    %v140 = vld.sshfl [vmem:[#allocation1 + $0x28] sm:$0xff pattern:$0x73625140]
    %v141 = vld.sshfl [vmem:[#allocation1 + $0x30] sm:$0xff pattern:$0x73625140]
    %v142 = vld.sshfl [vmem:[#allocation1 + $0x38] sm:$0xff pattern:$0x73625140]
    %143 = vst [vmem:[#allocation1] ss:$4 sm:$0xff] %v76
    %144 = vst [vmem:[%s93] ss:$4 sm:$0xff] %v77
    %v145 = vld.sshfl [vmem:[#allocation1] sm:$0xff pattern:$0x73625140]
    %v146 = vld.sshfl [vmem:[#allocation1 + $0x8] sm:$0xff pattern:$0x73625140]
    %v147 = vld.sshfl [vmem:[#allocation1 + $0x10] sm:$0xff pattern:$0x73625140]
    %v148 = vld.sshfl [vmem:[#allocation1 + $0x18] sm:$0xff pattern:$0x73625140]
    %v149 = vld.sshfl [vmem:[#allocation1 + $0x20] sm:$0xff pattern:$0x73625140]
    %v150 = vld.sshfl [vmem:[#allocation1 + $0x28] sm:$0xff pattern:$0x73625140]
    %v151 = vld.sshfl [vmem:[#allocation1 + $0x30] sm:$0xff pattern:$0x73625140]
    %v152 = vld.sshfl [vmem:[#allocation1 + $0x38] sm:$0xff pattern:$0x73625140]
    %153 = vst [vmem:[#allocation1] ss:$4 sm:$0xff] %v78
    %v154 = vld.sshfl [vmem:[#allocation1] sm:$0xff pattern:$0x73625140]
    %v204 = vpack.c.bf16 %v95, %v95
    %v205 = vpack.c.bf16 %v96, %v96
    %v206 = vpack.c.bf16 %v97, %v97
    %v207 = vpack.c.bf16 %v98, %v98
    %v208 = vpack.c.bf16 %v99, %v99
    %v209 = vpack.c.bf16 %v100, %v100
    %v210 = vpack.c.bf16 %v101, %v101
    %v211 = vpack.c.bf16 %v102, %v102
    %v212 = vpack.c.bf16 %v105, %v105
    %v213 = vpack.c.bf16 %v106, %v106
    %v214 = vpack.c.bf16 %v107, %v107
    %v215 = vpack.c.bf16 %v108, %v108
    %v216 = vpack.c.bf16 %v109, %v109
    %v217 = vpack.c.bf16 %v110, %v110
    %v218 = vpack.c.bf16 %v111, %v111
    %v219 = vpack.c.bf16 %v112, %v112
    %v220 = vpack.c.bf16 %v115, %v115
    %v221 = vpack.c.bf16 %v116, %v116
    %v222 = vpack.c.bf16 %v117, %v117
    %v223 = vpack.c.bf16 %v118, %v118
    %v224 = vpack.c.bf16 %v119, %v119
    %v225 = vpack.c.bf16 %v120, %v120
    %v226 = vpack.c.bf16 %v121, %v121
    %v227 = vpack.c.bf16 %v122, %v122
    %v228 = vpack.c.bf16 %v125, %v125
    %v229 = vpack.c.bf16 %v126, %v126
    %v230 = vpack.c.bf16 %v127, %v127
    %v231 = vpack.c.bf16 %v128, %v128
    %v232 = vpack.c.bf16 %v129, %v129
    %v233 = vpack.c.bf16 %v130, %v130
    %v234 = vpack.c.bf16 %v131, %v131
    %v235 = vpack.c.bf16 %v132, %v132
    %v236 = vpack.c.bf16 %v135, %v135
    %v237 = vpack.c.bf16 %v136, %v136
    %v238 = vpack.c.bf16 %v137, %v137
    %v239 = vpack.c.bf16 %v138, %v138
    %v240 = vpack.c.bf16 %v139, %v139
    %v241 = vpack.c.bf16 %v140, %v140
    %v242 = vpack.c.bf16 %v141, %v141
    %v243 = vpack.c.bf16 %v142, %v142
    %v244 = vpack.c.bf16 %v145, %v145
    %v245 = vpack.c.bf16 %v146, %v146
    %v246 = vpack.c.bf16 %v147, %v147
    %v247 = vpack.c.bf16 %v148, %v148
    %v248 = vpack.c.bf16 %v149, %v149
    %v249 = vpack.c.bf16 %v150, %v150
    %v250 = vpack.c.bf16 %v151, %v151
    %v251 = vpack.c.bf16 %v152, %v152
    %v252 = vpack.c.bf16 %v154, %v154
    %v253 = vld [vmem:[#allocation5] sm:$0xff]
    %v254 = vld [vmem:[#allocation5 + $0x8] sm:$0xff]
    %v255 = vld [vmem:[#allocation5 + $0x10] sm:$0xff]
    %v256 = vld [vmem:[#allocation5 + $0x18] sm:$0xff]
    %v257 = vld [vmem:[#allocation5 + $0x20] sm:$0xff]
    %v258 = vld [vmem:[#allocation5 + $0x28] sm:$0xff]
    %v259 = vld [vmem:[#allocation5 + $0x30] sm:$0xff]
    %v260 = vld [vmem:[#allocation5 + $0x38] sm:$0xff]
    %v261 = vld [vmem:[#allocation5 + $0x40] sm:$0xff]
    %v262 = vld [vmem:[#allocation5 + $0x48] sm:$0xff]
    %v263 = vld [vmem:[#allocation5 + $0x50] sm:$0xff]
    %v264 = vld [vmem:[#allocation5 + $0x58] sm:$0xff]
    %v265 = vld [vmem:[#allocation5 + $0x60] sm:$0xff]
    %v266 = vld [vmem:[#allocation5 + $0x68] sm:$0xff]
    %v267 = vld [vmem:[#allocation5 + $0x70] sm:$0xff]
    %v268 = vld [vmem:[#allocation5 + $0x78] sm:$0xff]
    %v269 = vld [vmem:[#allocation5 + $0x80] sm:$0xff]
    %v270 = vld [vmem:[#allocation5 + $0x88] sm:$0xff]
    %v271 = vld [vmem:[#allocation5 + $0x90] sm:$0xff]
    %v272 = vld [vmem:[#allocation5 + $0x98] sm:$0xff]
    %v273 = vld [vmem:[#allocation5 + $0xa0] sm:$0xff]
    %v274 = vld [vmem:[#allocation5 + $0xa8] sm:$0xff]
    %v275 = vld [vmem:[#allocation5 + $0xb0] sm:$0xff]
    %v276 = vld [vmem:[#allocation5 + $0xb8] sm:$0xff]
    %v277 = vld [vmem:[#allocation5 + $0xc0] sm:$0xf]
    %v278 = vld [vmem:[#allocation5 + $0xc4] sm:$0xff]
    %v279 = vld [vmem:[#allocation5 + $0xcc] sm:$0xff]
    %v280 = vld [vmem:[#allocation5 + $0xd4] sm:$0xff]
    %v281 = vld [vmem:[#allocation5 + $0xdc] sm:$0xff]
    %v282 = vld [vmem:[#allocation5 + $0xe4] sm:$0xff]
    %v283 = vld [vmem:[#allocation5 + $0xec] sm:$0xff]
    %v284 = vld [vmem:[#allocation5 + $0xf4] sm:$0xff]
    %v285 = vld [vmem:[#allocation5 + $0xfc] sm:$0xff]
    %v286 = vld [vmem:[#allocation5 + $0x104] sm:$0xff]
    %v287 = vld [vmem:[#allocation5 + $0x10c] sm:$0xff]
    %v288 = vld [vmem:[#allocation5 + $0x114] sm:$0xff]
    %v289 = vld [vmem:[#allocation5 + $0x11c] sm:$0xff]
    %v290 = vld [vmem:[#allocation5 + $0x124] sm:$0xff]
    %v291 = vld [vmem:[#allocation5 + $0x12c] sm:$0xff]
    %v292 = vld [vmem:[#allocation5 + $0x134] sm:$0xff]
    %v293 = vld [vmem:[#allocation5 + $0x13c] sm:$0xff]
    %v294 = vld [vmem:[#allocation5 + $0x144] sm:$0xff]
    %v295 = vld [vmem:[#allocation5 + $0x14c] sm:$0xff]
    %v296 = vld [vmem:[#allocation5 + $0x154] sm:$0xff]
    %v297 = vld [vmem:[#allocation5 + $0x15c] sm:$0xff]
    %v298 = vld [vmem:[#allocation5 + $0x164] sm:$0xff]
    %v299 = vld [vmem:[#allocation5 + $0x16c] sm:$0xff]
    %v300 = vld [vmem:[#allocation5 + $0x174] sm:$0xff]
    %v301 = vld [vmem:[#allocation5 + $0x17c] sm:$0xff]
    %v302 = vld [vmem:[#allocation5 + $0x184] sm:$0xf]
    %v303 = vld [vmem:[#allocation5 + $0x188] sm:$0xff]
    %v304 = vld [vmem:[#allocation5 + $0x190] sm:$0xff]
    %v305 = vld [vmem:[#allocation5 + $0x198] sm:$0xff]
    %v306 = vld [vmem:[#allocation5 + $0x1a0] sm:$0xff]
    %v307 = vld [vmem:[#allocation5 + $0x1a8] sm:$0xff]
    %v308 = vld [vmem:[#allocation5 + $0x1b0] sm:$0xff]
    %v309 = vld [vmem:[#allocation5 + $0x1b8] sm:$0xff]
    %v310 = vld [vmem:[#allocation5 + $0x1c0] sm:$0xff]
    %v311 = vld [vmem:[#allocation5 + $0x1c8] sm:$0xff]
    %v312 = vld [vmem:[#allocation5 + $0x1d0] sm:$0xff]
    %v313 = vld [vmem:[#allocation5 + $0x1d8] sm:$0xff]
    %v314 = vld [vmem:[#allocation5 + $0x1e0] sm:$0xff]
    %v315 = vld [vmem:[#allocation5 + $0x1e8] sm:$0xff]
    %v316 = vld [vmem:[#allocation5 + $0x1f0] sm:$0xff]
    %v317 = vld [vmem:[#allocation5 + $0x1f8] sm:$0xff]
    %v318 = vld [vmem:[#allocation5 + $0x200] sm:$0xff]
    %v319 = vld [vmem:[#allocation5 + $0x208] sm:$0xff]
    %v320 = vld [vmem:[#allocation5 + $0x210] sm:$0xff]
    %v321 = vld [vmem:[#allocation5 + $0x218] sm:$0xff]
    %v322 = vld [vmem:[#allocation5 + $0x220] sm:$0xff]
    %v323 = vld [vmem:[#allocation5 + $0x228] sm:$0xff]
    %v324 = vld [vmem:[#allocation5 + $0x230] sm:$0xff]
    %v325 = vld [vmem:[#allocation5 + $0x238] sm:$0xff]
    %v326 = vld [vmem:[#allocation5 + $0x240] sm:$0xff]
    %v327 = vld [vmem:[#allocation5 + $0x248] sm:$0xf]
    %v328 = vld [vmem:[#allocation5 + $0x24c] sm:$0xff]
    %v329 = vld [vmem:[#allocation5 + $0x254] sm:$0xff]
    %v330 = vld [vmem:[#allocation5 + $0x25c] sm:$0xff]
    %v331 = vld [vmem:[#allocation5 + $0x264] sm:$0xff]
    %v332 = vld [vmem:[#allocation5 + $0x26c] sm:$0xff]
    %v333 = vld [vmem:[#allocation5 + $0x274] sm:$0xff]
    %v334 = vld [vmem:[#allocation5 + $0x27c] sm:$0xff]
    %v335 = vld [vmem:[#allocation5 + $0x284] sm:$0xff]
    %v336 = vld [vmem:[#allocation5 + $0x28c] sm:$0xff]
    %v337 = vld [vmem:[#allocation5 + $0x294] sm:$0xff]
    %v338 = vld [vmem:[#allocation5 + $0x29c] sm:$0xff]
    %v339 = vld [vmem:[#allocation5 + $0x2a4] sm:$0xff]
    %v340 = vld [vmem:[#allocation5 + $0x2ac] sm:$0xff]
    %v341 = vld [vmem:[#allocation5 + $0x2b4] sm:$0xff]
    %v342 = vld [vmem:[#allocation5 + $0x2bc] sm:$0xff]
    %v343 = vld [vmem:[#allocation5 + $0x2c4] sm:$0xff]
    %v344 = vld [vmem:[#allocation5 + $0x2cc] sm:$0xff]
    %v345 = vld [vmem:[#allocation5 + $0x2d4] sm:$0xff]
    %v346 = vld [vmem:[#allocation5 + $0x2dc] sm:$0xff]
    %v347 = vld [vmem:[#allocation5 + $0x2e4] sm:$0xff]
    %v348 = vld [vmem:[#allocation5 + $0x2ec] sm:$0xff]
    %v349 = vld [vmem:[#allocation5 + $0x2f4] sm:$0xff]
    %v350 = vld [vmem:[#allocation5 + $0x2fc] sm:$0xff]
    %v351 = vld [vmem:[#allocation5 + $0x304] sm:$0xff]
    %v352 = vld [vmem:[#allocation5 + $0x30c] sm:$0xf]
    %v353 = vld [vmem:[#allocation5 + $0x310] sm:$0xff]
    %v354 = vld [vmem:[#allocation5 + $0x318] sm:$0xff]
    %v355 = vld [vmem:[#allocation5 + $0x320] sm:$0xff]
    %v356 = vld [vmem:[#allocation5 + $0x328] sm:$0xff]
    %v357 = vld [vmem:[#allocation5 + $0x330] sm:$0xff]
    %v358 = vld [vmem:[#allocation5 + $0x338] sm:$0xff]
    %v359 = vld [vmem:[#allocation5 + $0x340] sm:$0xff]
    %v360 = vld [vmem:[#allocation5 + $0x348] sm:$0xff]
    %v361 = vld [vmem:[#allocation5 + $0x350] sm:$0xff]
    %v362 = vld [vmem:[#allocation5 + $0x358] sm:$0xff]
    %v363 = vld [vmem:[#allocation5 + $0x360] sm:$0xff]
    %v364 = vld [vmem:[#allocation5 + $0x368] sm:$0xff]
    %v365 = vld [vmem:[#allocation5 + $0x370] sm:$0xff]
    %v366 = vld [vmem:[#allocation5 + $0x378] sm:$0xff]
    %v367 = vld [vmem:[#allocation5 + $0x380] sm:$0xff]
    %v368 = vld [vmem:[#allocation5 + $0x388] sm:$0xff]
    %v369 = vld [vmem:[#allocation5 + $0x390] sm:$0xff]
    %v370 = vld [vmem:[#allocation5 + $0x398] sm:$0xff]
    %v371 = vld [vmem:[#allocation5 + $0x3a0] sm:$0xff]
    %v372 = vld [vmem:[#allocation5 + $0x3a8] sm:$0xff]
    %v373 = vld [vmem:[#allocation5 + $0x3b0] sm:$0xff]
    %v374 = vld [vmem:[#allocation5 + $0x3b8] sm:$0xff]
    %v375 = vld [vmem:[#allocation5 + $0x3c0] sm:$0xff]
    %v376 = vld [vmem:[#allocation5 + $0x3c8] sm:$0xff]
    %v377 = vld [vmem:[#allocation5 + $0x3d0] sm:$0xf]
    %v378 = vld [vmem:[#allocation5 + $0x3d4] sm:$0xff]
    %v379 = vld [vmem:[#allocation5 + $0x3dc] sm:$0xff]
    %v380 = vld [vmem:[#allocation5 + $0x3e4] sm:$0xff]
    %v381 = vld [vmem:[#allocation5 + $0x3ec] sm:$0xff]
    %v382 = vld [vmem:[#allocation5 + $0x3f4] sm:$0xff]
    %v383 = vld [vmem:[#allocation5 + $0x3fc] sm:$0xff]
    %v384 = vld [vmem:[#allocation5 + $0x404] sm:$0xff]
    %v385 = vld [vmem:[#allocation5 + $0x40c] sm:$0xff]
    %v386 = vld [vmem:[#allocation5 + $0x414] sm:$0xff]
    %v387 = vld [vmem:[#allocation5 + $0x41c] sm:$0xff]
    %v388 = vld [vmem:[#allocation5 + $0x424] sm:$0xff]
    %v389 = vld [vmem:[#allocation5 + $0x42c] sm:$0xff]
    %v390 = vld [vmem:[#allocation5 + $0x434] sm:$0xff]
    %v391 = vld [vmem:[#allocation5 + $0x43c] sm:$0xff]
    %v392 = vld [vmem:[#allocation5 + $0x444] sm:$0xff]
    %v393 = vld [vmem:[#allocation5 + $0x44c] sm:$0xff]
    %v394 = vld [vmem:[#allocation5 + $0x454] sm:$0xff]
    %v395 = vld [vmem:[#allocation5 + $0x45c] sm:$0xff]
    %v396 = vld [vmem:[#allocation5 + $0x464] sm:$0xff]
    %v397 = vld [vmem:[#allocation5 + $0x46c] sm:$0xff]
    %v398 = vld [vmem:[#allocation5 + $0x474] sm:$0xff]
    %v399 = vld [vmem:[#allocation5 + $0x47c] sm:$0xff]
    %v400 = vld [vmem:[#allocation5 + $0x484] sm:$0xff]
    %v401 = vld [vmem:[#allocation5 + $0x48c] sm:$0xff]
    %v402 = vld [vmem:[#allocation5 + $0x494] sm:$0xf]
    %v403 = vld [vmem:[#allocation5 + $0x498] sm:$0xff]
    %v404 = vld [vmem:[#allocation5 + $0x4a0] sm:$0xff]
    %v405 = vld [vmem:[#allocation5 + $0x4a8] sm:$0xff]
    %v406 = vld [vmem:[#allocation5 + $0x4b0] sm:$0xff]
    %v407 = vld [vmem:[#allocation5 + $0x4b8] sm:$0xff]
    %v408 = vld [vmem:[#allocation5 + $0x4c0] sm:$0xff]
    %v409 = vld [vmem:[#allocation5 + $0x4c8] sm:$0xff]
    %v410 = vld [vmem:[#allocation5 + $0x4d0] sm:$0xff]
    %v411 = vld [vmem:[#allocation5 + $0x4d8] sm:$0xff]
    %v412 = vld [vmem:[#allocation5 + $0x4e0] sm:$0xff]
    %v413 = vld [vmem:[#allocation5 + $0x4e8] sm:$0xff]
    %v414 = vld [vmem:[#allocation5 + $0x4f0] sm:$0xff]
    %v415 = vld [vmem:[#allocation5 + $0x4f8] sm:$0xff]
    %v416 = vld [vmem:[#allocation5 + $0x500] sm:$0xff]
    %v417 = vld [vmem:[#allocation5 + $0x508] sm:$0xff]
    %v418 = vld [vmem:[#allocation5 + $0x510] sm:$0xff]
    %v419 = vld [vmem:[#allocation5 + $0x518] sm:$0xff]
    %v420 = vld [vmem:[#allocation5 + $0x520] sm:$0xff]
    %v421 = vld [vmem:[#allocation5 + $0x528] sm:$0xff]
    %v422 = vld [vmem:[#allocation5 + $0x530] sm:$0xff]
    %v423 = vld [vmem:[#allocation5 + $0x538] sm:$0xff]
    %v424 = vld [vmem:[#allocation5 + $0x540] sm:$0xff]
    %v425 = vld [vmem:[#allocation5 + $0x548] sm:$0xff]
    %v426 = vld [vmem:[#allocation5 + $0x550] sm:$0xff]
    %v427 = vld [vmem:[#allocation5 + $0x558] sm:$0xf]
    %v428 = vld [vmem:[#allocation5 + $0x55c] sm:$0xff]
    %v429 = vld [vmem:[#allocation5 + $0x564] sm:$0xff]
    %v430 = vld [vmem:[#allocation5 + $0x56c] sm:$0xff]
    %v431 = vld [vmem:[#allocation5 + $0x574] sm:$0xff]
    %v432 = vld [vmem:[#allocation5 + $0x57c] sm:$0xff]
    %v433 = vld [vmem:[#allocation5 + $0x584] sm:$0xff]
    %v434 = vld [vmem:[#allocation5 + $0x58c] sm:$0xff]
    %v435 = vld [vmem:[#allocation5 + $0x594] sm:$0xff]
    %v436 = vld [vmem:[#allocation5 + $0x59c] sm:$0xff]
    %v437 = vld [vmem:[#allocation5 + $0x5a4] sm:$0xff]
    %v438 = vld [vmem:[#allocation5 + $0x5ac] sm:$0xff]
    %v439 = vld [vmem:[#allocation5 + $0x5b4] sm:$0xff]
    %v440 = vld [vmem:[#allocation5 + $0x5bc] sm:$0xff]
    %v441 = vld [vmem:[#allocation5 + $0x5c4] sm:$0xff]
    %v442 = vld [vmem:[#allocation5 + $0x5cc] sm:$0xff]
    %v443 = vld [vmem:[#allocation5 + $0x5d4] sm:$0xff]
    %v444 = vld [vmem:[#allocation5 + $0x5dc] sm:$0xff]
    %v445 = vld [vmem:[#allocation5 + $0x5e4] sm:$0xff]
    %v446 = vld [vmem:[#allocation5 + $0x5ec] sm:$0xff]
    %v447 = vld [vmem:[#allocation5 + $0x5f4] sm:$0xff]
    %v448 = vld [vmem:[#allocation5 + $0x5fc] sm:$0xff]
    %v449 = vld [vmem:[#allocation5 + $0x604] sm:$0xff]
    %v450 = vld [vmem:[#allocation5 + $0x60c] sm:$0xff]
    %v451 = vld [vmem:[#allocation5 + $0x614] sm:$0xff]
    %v452 = vld [vmem:[#allocation5 + $0x61c] sm:$0xf]
    %v453 = vld [vmem:[#allocation7] sm:$0x1]
    %v455 = vperm.slane %v453, 0
    %v657 = vunpack.c.l.b16 %v253
    %v658 = vunpack.c.h.b16 %v253
    %v659 = vunpack.c.l.b16 %v254
    %v660 = vunpack.c.h.b16 %v254
    %v661 = vunpack.c.l.b16 %v255
    %v662 = vunpack.c.h.b16 %v255
    %v663 = vunpack.c.l.b16 %v256
    %v664 = vunpack.c.h.b16 %v256
    %v665 = vunpack.c.l.b16 %v257
    %v666 = vunpack.c.h.b16 %v257
    %v667 = vunpack.c.l.b16 %v258
    %v668 = vunpack.c.h.b16 %v258
    %v669 = vunpack.c.l.b16 %v259
    %v670 = vunpack.c.h.b16 %v259
    %v671 = vunpack.c.l.b16 %v260
    %v672 = vunpack.c.h.b16 %v260
    %v673 = vunpack.c.l.b16 %v261
    %v674 = vunpack.c.h.b16 %v261
    %v675 = vunpack.c.l.b16 %v262
    %v676 = vunpack.c.h.b16 %v262
    %v677 = vunpack.c.l.b16 %v263
    %v678 = vunpack.c.h.b16 %v263
    %v679 = vunpack.c.l.b16 %v264
    %v680 = vunpack.c.h.b16 %v264
    %v681 = vunpack.c.l.b16 %v265
    %v682 = vunpack.c.h.b16 %v265
    %v683 = vunpack.c.l.b16 %v266
    %v684 = vunpack.c.h.b16 %v266
    %v685 = vunpack.c.l.b16 %v267
    %v686 = vunpack.c.h.b16 %v267
    %v687 = vunpack.c.l.b16 %v268
    %v688 = vunpack.c.h.b16 %v268
    %v689 = vunpack.c.l.b16 %v269
    %v690 = vunpack.c.h.b16 %v269
    %v691 = vunpack.c.l.b16 %v270
    %v692 = vunpack.c.h.b16 %v270
    %v693 = vunpack.c.l.b16 %v271
    %v694 = vunpack.c.h.b16 %v271
    %v695 = vunpack.c.l.b16 %v272
    %v696 = vunpack.c.h.b16 %v272
    %v697 = vunpack.c.l.b16 %v273
    %v698 = vunpack.c.h.b16 %v273
    %v699 = vunpack.c.l.b16 %v274
    %v700 = vunpack.c.h.b16 %v274
    %v701 = vunpack.c.l.b16 %v275
    %v702 = vunpack.c.h.b16 %v275
    %v703 = vunpack.c.l.b16 %v276
    %v704 = vunpack.c.h.b16 %v276
    %v705 = vunpack.c.l.b16 %v277
    %v706 = vunpack.c.l.b16 %v278
    %v707 = vunpack.c.h.b16 %v278
    %v708 = vunpack.c.l.b16 %v279
    %v709 = vunpack.c.h.b16 %v279
    %v710 = vunpack.c.l.b16 %v280
    %v711 = vunpack.c.h.b16 %v280
    %v712 = vunpack.c.l.b16 %v281
    %v713 = vunpack.c.h.b16 %v281
    %v714 = vunpack.c.l.b16 %v282
    %v715 = vunpack.c.h.b16 %v282
    %v716 = vunpack.c.l.b16 %v283
    %v717 = vunpack.c.h.b16 %v283
    %v718 = vunpack.c.l.b16 %v284
    %v719 = vunpack.c.h.b16 %v284
    %v720 = vunpack.c.l.b16 %v285
    %v721 = vunpack.c.h.b16 %v285
    %v722 = vunpack.c.l.b16 %v286
    %v723 = vunpack.c.h.b16 %v286
    %v724 = vunpack.c.l.b16 %v287
    %v725 = vunpack.c.h.b16 %v287
    %v726 = vunpack.c.l.b16 %v288
    %v727 = vunpack.c.h.b16 %v288
    %v728 = vunpack.c.l.b16 %v289
    %v729 = vunpack.c.h.b16 %v289
    %v730 = vunpack.c.l.b16 %v290
    %v731 = vunpack.c.h.b16 %v290
    %v732 = vunpack.c.l.b16 %v291
    %v733 = vunpack.c.h.b16 %v291
    %v734 = vunpack.c.l.b16 %v292
    %v735 = vunpack.c.h.b16 %v292
    %v736 = vunpack.c.l.b16 %v293
    %v737 = vunpack.c.h.b16 %v293
    %v738 = vunpack.c.l.b16 %v294
    %v739 = vunpack.c.h.b16 %v294
    %v740 = vunpack.c.l.b16 %v295
    %v741 = vunpack.c.h.b16 %v295
    %v742 = vunpack.c.l.b16 %v296
    %v743 = vunpack.c.h.b16 %v296
    %v744 = vunpack.c.l.b16 %v297
    %v745 = vunpack.c.h.b16 %v297
    %v746 = vunpack.c.l.b16 %v298
    %v747 = vunpack.c.h.b16 %v298
    %v748 = vunpack.c.l.b16 %v299
    %v749 = vunpack.c.h.b16 %v299
    %v750 = vunpack.c.l.b16 %v300
    %v751 = vunpack.c.h.b16 %v300
    %v752 = vunpack.c.l.b16 %v301
    %v753 = vunpack.c.h.b16 %v301
    %v754 = vunpack.c.l.b16 %v302
    %v755 = vunpack.c.l.b16 %v303
    %v756 = vunpack.c.h.b16 %v303
    %v757 = vunpack.c.l.b16 %v304
    %v758 = vunpack.c.h.b16 %v304
    %v759 = vunpack.c.l.b16 %v305
    %v760 = vunpack.c.h.b16 %v305
    %v761 = vunpack.c.l.b16 %v306
    %v762 = vunpack.c.h.b16 %v306
    %v763 = vunpack.c.l.b16 %v307
    %v764 = vunpack.c.h.b16 %v307
    %v765 = vunpack.c.l.b16 %v308
    %v766 = vunpack.c.h.b16 %v308
    %v767 = vunpack.c.l.b16 %v309
    %v768 = vunpack.c.h.b16 %v309
    %v769 = vunpack.c.l.b16 %v310
    %v770 = vunpack.c.h.b16 %v310
    %v771 = vunpack.c.l.b16 %v311
    %v772 = vunpack.c.h.b16 %v311
    %v773 = vunpack.c.l.b16 %v312
    %v774 = vunpack.c.h.b16 %v312
    %v775 = vunpack.c.l.b16 %v313
    %v776 = vunpack.c.h.b16 %v313
    %v777 = vunpack.c.l.b16 %v314
    %v778 = vunpack.c.h.b16 %v314
    %v779 = vunpack.c.l.b16 %v315
    %v780 = vunpack.c.h.b16 %v315
    %v781 = vunpack.c.l.b16 %v316
    %v782 = vunpack.c.h.b16 %v316
    %v783 = vunpack.c.l.b16 %v317
    %v784 = vunpack.c.h.b16 %v317
    %v785 = vunpack.c.l.b16 %v318
    %v786 = vunpack.c.h.b16 %v318
    %v787 = vunpack.c.l.b16 %v319
    %v788 = vunpack.c.h.b16 %v319
    %v789 = vunpack.c.l.b16 %v320
    %v790 = vunpack.c.h.b16 %v320
    %v791 = vunpack.c.l.b16 %v321
    %v792 = vunpack.c.h.b16 %v321
    %v793 = vunpack.c.l.b16 %v322
    %v794 = vunpack.c.h.b16 %v322
    %v795 = vunpack.c.l.b16 %v323
    %v796 = vunpack.c.h.b16 %v323
    %v797 = vunpack.c.l.b16 %v324
    %v798 = vunpack.c.h.b16 %v324
    %v799 = vunpack.c.l.b16 %v325
    %v800 = vunpack.c.h.b16 %v325
    %v801 = vunpack.c.l.b16 %v326
    %v802 = vunpack.c.h.b16 %v326
    %v803 = vunpack.c.l.b16 %v327
    %v804 = vunpack.c.l.b16 %v328
    %v805 = vunpack.c.h.b16 %v328
    %v806 = vunpack.c.l.b16 %v329
    %v807 = vunpack.c.h.b16 %v329
    %v808 = vunpack.c.l.b16 %v330
    %v809 = vunpack.c.h.b16 %v330
    %v810 = vunpack.c.l.b16 %v331
    %v811 = vunpack.c.h.b16 %v331
    %v812 = vunpack.c.l.b16 %v332
    %v813 = vunpack.c.h.b16 %v332
    %v814 = vunpack.c.l.b16 %v333
    %v815 = vunpack.c.h.b16 %v333
    %v816 = vunpack.c.l.b16 %v334
    %v817 = vunpack.c.h.b16 %v334
    %v818 = vunpack.c.l.b16 %v335
    %v819 = vunpack.c.h.b16 %v335
    %v820 = vunpack.c.l.b16 %v336
    %v821 = vunpack.c.h.b16 %v336
    %v822 = vunpack.c.l.b16 %v337
    %v823 = vunpack.c.h.b16 %v337
    %v824 = vunpack.c.l.b16 %v338
    %v825 = vunpack.c.h.b16 %v338
    %v826 = vunpack.c.l.b16 %v339
    %v827 = vunpack.c.h.b16 %v339
    %v828 = vunpack.c.l.b16 %v340
    %v829 = vunpack.c.h.b16 %v340
    %v830 = vunpack.c.l.b16 %v341
    %v831 = vunpack.c.h.b16 %v341
    %v832 = vunpack.c.l.b16 %v342
    %v833 = vunpack.c.h.b16 %v342
    %v834 = vunpack.c.l.b16 %v343
    %v835 = vunpack.c.h.b16 %v343
    %v836 = vunpack.c.l.b16 %v344
    %v837 = vunpack.c.h.b16 %v344
    %v838 = vunpack.c.l.b16 %v345
    %v839 = vunpack.c.h.b16 %v345
    %v840 = vunpack.c.l.b16 %v346
    %v841 = vunpack.c.h.b16 %v346
    %v842 = vunpack.c.l.b16 %v347
    %v843 = vunpack.c.h.b16 %v347
    %v844 = vunpack.c.l.b16 %v348
    %v845 = vunpack.c.h.b16 %v348
    %v846 = vunpack.c.l.b16 %v349
    %v847 = vunpack.c.h.b16 %v349
    %v848 = vunpack.c.l.b16 %v350
    %v849 = vunpack.c.h.b16 %v350
    %v850 = vunpack.c.l.b16 %v351
    %v851 = vunpack.c.h.b16 %v351
    %v852 = vunpack.c.l.b16 %v352
    %v853 = vunpack.c.l.b16 %v353
    %v854 = vunpack.c.h.b16 %v353
    %v855 = vunpack.c.l.b16 %v354
    %v856 = vunpack.c.h.b16 %v354
    %v857 = vunpack.c.l.b16 %v355
    %v858 = vunpack.c.h.b16 %v355
    %v859 = vunpack.c.l.b16 %v356
    %v860 = vunpack.c.h.b16 %v356
    %v861 = vunpack.c.l.b16 %v357
    %v862 = vunpack.c.h.b16 %v357
    %v863 = vunpack.c.l.b16 %v358
    %v864 = vunpack.c.h.b16 %v358
    %v865 = vunpack.c.l.b16 %v359
    %v866 = vunpack.c.h.b16 %v359
    %v867 = vunpack.c.l.b16 %v360
    %v868 = vunpack.c.h.b16 %v360
    %v869 = vunpack.c.l.b16 %v361
    %v870 = vunpack.c.h.b16 %v361
    %v871 = vunpack.c.l.b16 %v362
    %v872 = vunpack.c.h.b16 %v362
    %v873 = vunpack.c.l.b16 %v363
    %v874 = vunpack.c.h.b16 %v363
    %v875 = vunpack.c.l.b16 %v364
    %v876 = vunpack.c.h.b16 %v364
    %v877 = vunpack.c.l.b16 %v365
    %v878 = vunpack.c.h.b16 %v365
    %v879 = vunpack.c.l.b16 %v366
    %v880 = vunpack.c.h.b16 %v366
    %v881 = vunpack.c.l.b16 %v367
    %v882 = vunpack.c.h.b16 %v367
    %v883 = vunpack.c.l.b16 %v368
    %v884 = vunpack.c.h.b16 %v368
    %v885 = vunpack.c.l.b16 %v369
    %v886 = vunpack.c.h.b16 %v369
    %v887 = vunpack.c.l.b16 %v370
    %v888 = vunpack.c.h.b16 %v370
    %v889 = vunpack.c.l.b16 %v371
    %v890 = vunpack.c.h.b16 %v371
    %v891 = vunpack.c.l.b16 %v372
    %v892 = vunpack.c.h.b16 %v372
    %v893 = vunpack.c.l.b16 %v373
    %v894 = vunpack.c.h.b16 %v373
    %v895 = vunpack.c.l.b16 %v374
    %v896 = vunpack.c.h.b16 %v374
    %v897 = vunpack.c.l.b16 %v375
    %v898 = vunpack.c.h.b16 %v375
    %v899 = vunpack.c.l.b16 %v376
    %v900 = vunpack.c.h.b16 %v376
    %v901 = vunpack.c.l.b16 %v377
    %v902 = vunpack.c.l.b16 %v378
    %v903 = vunpack.c.h.b16 %v378
    %v904 = vunpack.c.l.b16 %v379
    %v905 = vunpack.c.h.b16 %v379
    %v906 = vunpack.c.l.b16 %v380
    %v907 = vunpack.c.h.b16 %v380
    %v908 = vunpack.c.l.b16 %v381
    %v909 = vunpack.c.h.b16 %v381
    %v910 = vunpack.c.l.b16 %v382
    %v911 = vunpack.c.h.b16 %v382
    %v912 = vunpack.c.l.b16 %v383
    %v913 = vunpack.c.h.b16 %v383
    %v914 = vunpack.c.l.b16 %v384
    %v915 = vunpack.c.h.b16 %v384
    %v916 = vunpack.c.l.b16 %v385
    %v917 = vunpack.c.h.b16 %v385
    %v918 = vunpack.c.l.b16 %v386
    %v919 = vunpack.c.h.b16 %v386
    %v920 = vunpack.c.l.b16 %v387
    %v921 = vunpack.c.h.b16 %v387
    %v922 = vunpack.c.l.b16 %v388
    %v923 = vunpack.c.h.b16 %v388
    %v924 = vunpack.c.l.b16 %v389
    %v925 = vunpack.c.h.b16 %v389
    %v926 = vunpack.c.l.b16 %v390
    %v927 = vunpack.c.h.b16 %v390
    %v928 = vunpack.c.l.b16 %v391
    %v929 = vunpack.c.h.b16 %v391
    %v930 = vunpack.c.l.b16 %v392
    %v931 = vunpack.c.h.b16 %v392
    %v932 = vunpack.c.l.b16 %v393
    %v933 = vunpack.c.h.b16 %v393
    %v934 = vunpack.c.l.b16 %v394
    %v935 = vunpack.c.h.b16 %v394
    %v936 = vunpack.c.l.b16 %v395
    %v937 = vunpack.c.h.b16 %v395
    %v938 = vunpack.c.l.b16 %v396
    %v939 = vunpack.c.h.b16 %v396
    %v940 = vunpack.c.l.b16 %v397
    %v941 = vunpack.c.h.b16 %v397
    %v942 = vunpack.c.l.b16 %v398
    %v943 = vunpack.c.h.b16 %v398
    %v944 = vunpack.c.l.b16 %v399
    %v945 = vunpack.c.h.b16 %v399
    %v946 = vunpack.c.l.b16 %v400
    %v947 = vunpack.c.h.b16 %v400
    %v948 = vunpack.c.l.b16 %v401
    %v949 = vunpack.c.h.b16 %v401
    %v950 = vunpack.c.l.b16 %v402
    %v951 = vunpack.c.l.b16 %v403
    %v952 = vunpack.c.h.b16 %v403
    %v953 = vunpack.c.l.b16 %v404
    %v954 = vunpack.c.h.b16 %v404
    %v955 = vunpack.c.l.b16 %v405
    %v956 = vunpack.c.h.b16 %v405
    %v957 = vunpack.c.l.b16 %v406
    %v958 = vunpack.c.h.b16 %v406
    %v959 = vunpack.c.l.b16 %v407
    %v960 = vunpack.c.h.b16 %v407
    %v961 = vunpack.c.l.b16 %v408
    %v962 = vunpack.c.h.b16 %v408
    %v963 = vunpack.c.l.b16 %v409
    %v964 = vunpack.c.h.b16 %v409
    %v965 = vunpack.c.l.b16 %v410
    %v966 = vunpack.c.h.b16 %v410
    %v967 = vunpack.c.l.b16 %v411
    %v968 = vunpack.c.h.b16 %v411
    %v969 = vunpack.c.l.b16 %v412
    %v970 = vunpack.c.h.b16 %v412
    %v971 = vunpack.c.l.b16 %v413
    %v972 = vunpack.c.h.b16 %v413
    %v973 = vunpack.c.l.b16 %v414
    %v974 = vunpack.c.h.b16 %v414
    %v975 = vunpack.c.l.b16 %v415
    %v976 = vunpack.c.h.b16 %v415
    %v977 = vunpack.c.l.b16 %v416
    %v978 = vunpack.c.h.b16 %v416
    %v979 = vunpack.c.l.b16 %v417
    %v980 = vunpack.c.h.b16 %v417
    %v981 = vunpack.c.l.b16 %v418
    %v982 = vunpack.c.h.b16 %v418
    %v983 = vunpack.c.l.b16 %v419
    %v984 = vunpack.c.h.b16 %v419
    %v985 = vunpack.c.l.b16 %v420
    %v986 = vunpack.c.h.b16 %v420
    %v987 = vunpack.c.l.b16 %v421
    %v988 = vunpack.c.h.b16 %v421
    %v989 = vunpack.c.l.b16 %v422
    %v990 = vunpack.c.h.b16 %v422
    %v991 = vunpack.c.l.b16 %v423
    %v992 = vunpack.c.h.b16 %v423
    %v993 = vunpack.c.l.b16 %v424
    %v994 = vunpack.c.h.b16 %v424
    %v995 = vunpack.c.l.b16 %v425
    %v996 = vunpack.c.h.b16 %v425
    %v997 = vunpack.c.l.b16 %v426
    %v998 = vunpack.c.h.b16 %v426
    %v999 = vunpack.c.l.b16 %v427
    %v1000 = vunpack.c.l.b16 %v428
    %v1001 = vunpack.c.h.b16 %v428
    %v1002 = vunpack.c.l.b16 %v429
    %v1003 = vunpack.c.h.b16 %v429
    %v1004 = vunpack.c.l.b16 %v430
    %v1005 = vunpack.c.h.b16 %v430
    %v1006 = vunpack.c.l.b16 %v431
    %v1007 = vunpack.c.h.b16 %v431
    %v1008 = vunpack.c.l.b16 %v432
    %v1009 = vunpack.c.h.b16 %v432
    %v1010 = vunpack.c.l.b16 %v433
    %v1011 = vunpack.c.h.b16 %v433
    %v1012 = vunpack.c.l.b16 %v434
    %v1013 = vunpack.c.h.b16 %v434
    %v1014 = vunpack.c.l.b16 %v435
    %v1015 = vunpack.c.h.b16 %v435
    %v1016 = vunpack.c.l.b16 %v436
    %v1017 = vunpack.c.h.b16 %v436
    %v1018 = vunpack.c.l.b16 %v437
    %v1019 = vunpack.c.h.b16 %v437
    %v1020 = vunpack.c.l.b16 %v438
    %v1021 = vunpack.c.h.b16 %v438
    %v1022 = vunpack.c.l.b16 %v439
    %v1023 = vunpack.c.h.b16 %v439
    %v1024 = vunpack.c.l.b16 %v440
    %v1025 = vunpack.c.h.b16 %v440
    %v1026 = vunpack.c.l.b16 %v441
    %v1027 = vunpack.c.h.b16 %v441
    %v1028 = vunpack.c.l.b16 %v442
    %v1029 = vunpack.c.h.b16 %v442
    %v1030 = vunpack.c.l.b16 %v443
    %v1031 = vunpack.c.h.b16 %v443
    %v1032 = vunpack.c.l.b16 %v444
    %v1033 = vunpack.c.h.b16 %v444
    %v1034 = vunpack.c.l.b16 %v445
    %v1035 = vunpack.c.h.b16 %v445
    %v1036 = vunpack.c.l.b16 %v446
    %v1037 = vunpack.c.h.b16 %v446
    %v1038 = vunpack.c.l.b16 %v447
    %v1039 = vunpack.c.h.b16 %v447
    %v1040 = vunpack.c.l.b16 %v448
    %v1041 = vunpack.c.h.b16 %v448
    %v1042 = vunpack.c.l.b16 %v449
    %v1043 = vunpack.c.h.b16 %v449
    %v1044 = vunpack.c.l.b16 %v450
    %v1045 = vunpack.c.h.b16 %v450
    %v1046 = vunpack.c.l.b16 %v451
    %v1047 = vunpack.c.h.b16 %v451
    %v1048 = vunpack.c.l.b16 %v452
    %v1049 = vpack.c.b16 %v706, %v657
    %v1050 = vpack.c.b16 %v707, %v658
    %v1051 = vpack.c.b16 %v708, %v659
    %v1052 = vpack.c.b16 %v709, %v660
    %v1053 = vpack.c.b16 %v710, %v661
    %v1054 = vpack.c.b16 %v711, %v662
    %v1055 = vpack.c.b16 %v712, %v663
    %v1056 = vpack.c.b16 %v713, %v664
    %v1057 = vpack.c.b16 %v714, %v665
    %v1058 = vpack.c.b16 %v715, %v666
    %v1059 = vpack.c.b16 %v716, %v667
    %v1060 = vpack.c.b16 %v717, %v668
    %v1061 = vpack.c.b16 %v718, %v669
    %v1062 = vpack.c.b16 %v719, %v670
    %v1063 = vpack.c.b16 %v720, %v671
    %v1064 = vpack.c.b16 %v721, %v672
    %v1065 = vpack.c.b16 %v722, %v673
    %v1066 = vpack.c.b16 %v723, %v674
    %v1067 = vpack.c.b16 %v724, %v675
    %v1068 = vpack.c.b16 %v725, %v676
    %v1069 = vpack.c.b16 %v726, %v677
    %v1070 = vpack.c.b16 %v727, %v678
    %v1071 = vpack.c.b16 %v728, %v679
    %v1072 = vpack.c.b16 %v729, %v680
    %v1073 = vpack.c.b16 %v730, %v681
    %v1074 = vpack.c.b16 %v731, %v682
    %v1075 = vpack.c.b16 %v732, %v683
    %v1076 = vpack.c.b16 %v733, %v684
    %v1077 = vpack.c.b16 %v734, %v685
    %v1078 = vpack.c.b16 %v735, %v686
    %v1079 = vpack.c.b16 %v736, %v687
    %v1080 = vpack.c.b16 %v737, %v688
    %v1081 = vpack.c.b16 %v738, %v689
    %v1082 = vpack.c.b16 %v739, %v690
    %v1083 = vpack.c.b16 %v740, %v691
    %v1084 = vpack.c.b16 %v741, %v692
    %v1085 = vpack.c.b16 %v742, %v693
    %v1086 = vpack.c.b16 %v743, %v694
    %v1087 = vpack.c.b16 %v744, %v695
    %v1088 = vpack.c.b16 %v745, %v696
    %v1089 = vpack.c.b16 %v746, %v697
    %v1090 = vpack.c.b16 %v747, %v698
    %v1091 = vpack.c.b16 %v748, %v699
    %v1092 = vpack.c.b16 %v749, %v700
    %v1093 = vpack.c.b16 %v750, %v701
    %v1094 = vpack.c.b16 %v751, %v702
    %v1095 = vpack.c.b16 %v752, %v703
    %v1096 = vpack.c.b16 %v753, %v704
    %v1097 = vpack.c.b16 %v754, %v705
    %v1098 = vpack.c.b16 %v804, %v755
    %v1099 = vpack.c.b16 %v805, %v756
    %v1100 = vpack.c.b16 %v806, %v757
    %v1101 = vpack.c.b16 %v807, %v758
    %v1102 = vpack.c.b16 %v808, %v759
    %v1103 = vpack.c.b16 %v809, %v760
    %v1104 = vpack.c.b16 %v810, %v761
    %v1105 = vpack.c.b16 %v811, %v762
    %v1106 = vpack.c.b16 %v812, %v763
    %v1107 = vpack.c.b16 %v813, %v764
    %v1108 = vpack.c.b16 %v814, %v765
    %v1109 = vpack.c.b16 %v815, %v766
    %v1110 = vpack.c.b16 %v816, %v767
    %v1111 = vpack.c.b16 %v817, %v768
    %v1112 = vpack.c.b16 %v818, %v769
    %v1113 = vpack.c.b16 %v819, %v770
    %v1114 = vpack.c.b16 %v820, %v771
    %v1115 = vpack.c.b16 %v821, %v772
    %v1116 = vpack.c.b16 %v822, %v773
    %v1117 = vpack.c.b16 %v823, %v774
    %v1118 = vpack.c.b16 %v824, %v775
    %v1119 = vpack.c.b16 %v825, %v776
    %v1120 = vpack.c.b16 %v826, %v777
    %v1121 = vpack.c.b16 %v827, %v778
    %v1122 = vpack.c.b16 %v828, %v779
    %v1123 = vpack.c.b16 %v829, %v780
    %v1124 = vpack.c.b16 %v830, %v781
    %v1125 = vpack.c.b16 %v831, %v782
    %v1126 = vpack.c.b16 %v832, %v783
    %v1127 = vpack.c.b16 %v833, %v784
    %v1128 = vpack.c.b16 %v834, %v785
    %v1129 = vpack.c.b16 %v835, %v786
    %v1130 = vpack.c.b16 %v836, %v787
    %v1131 = vpack.c.b16 %v837, %v788
    %v1132 = vpack.c.b16 %v838, %v789
    %v1133 = vpack.c.b16 %v839, %v790
    %v1134 = vpack.c.b16 %v840, %v791
    %v1135 = vpack.c.b16 %v841, %v792
    %v1136 = vpack.c.b16 %v842, %v793
    %v1137 = vpack.c.b16 %v843, %v794
    %v1138 = vpack.c.b16 %v844, %v795
    %v1139 = vpack.c.b16 %v845, %v796
    %v1140 = vpack.c.b16 %v846, %v797
    %v1141 = vpack.c.b16 %v847, %v798
    %v1142 = vpack.c.b16 %v848, %v799
    %v1143 = vpack.c.b16 %v849, %v800
    %v1144 = vpack.c.b16 %v850, %v801
    %v1145 = vpack.c.b16 %v851, %v802
    %v1146 = vpack.c.b16 %v852, %v803
    %v1147 = vpack.c.b16 %v902, %v853
    %v1148 = vpack.c.b16 %v903, %v854
    %v1149 = vpack.c.b16 %v904, %v855
    %v1150 = vpack.c.b16 %v905, %v856
    %v1151 = vpack.c.b16 %v906, %v857
    %v1152 = vpack.c.b16 %v907, %v858
    %v1153 = vpack.c.b16 %v908, %v859
    %v1154 = vpack.c.b16 %v909, %v860
    %v1155 = vpack.c.b16 %v910, %v861
    %v1156 = vpack.c.b16 %v911, %v862
    %v1157 = vpack.c.b16 %v912, %v863
    %v1158 = vpack.c.b16 %v913, %v864
    %v1159 = vpack.c.b16 %v914, %v865
    %v1160 = vpack.c.b16 %v915, %v866
    %v1161 = vpack.c.b16 %v916, %v867
    %v1162 = vpack.c.b16 %v917, %v868
    %v1163 = vpack.c.b16 %v918, %v869
    %v1164 = vpack.c.b16 %v919, %v870
    %v1165 = vpack.c.b16 %v920, %v871
    %v1166 = vpack.c.b16 %v921, %v872
    %v1167 = vpack.c.b16 %v922, %v873
    %v1168 = vpack.c.b16 %v923, %v874
    %v1169 = vpack.c.b16 %v924, %v875
    %v1170 = vpack.c.b16 %v925, %v876
    %v1171 = vpack.c.b16 %v926, %v877
    %v1172 = vpack.c.b16 %v927, %v878
    %v1173 = vpack.c.b16 %v928, %v879
    %v1174 = vpack.c.b16 %v929, %v880
    %v1175 = vpack.c.b16 %v930, %v881
    %v1176 = vpack.c.b16 %v931, %v882
    %v1177 = vpack.c.b16 %v932, %v883
    %v1178 = vpack.c.b16 %v933, %v884
    %v1179 = vpack.c.b16 %v934, %v885
    %v1180 = vpack.c.b16 %v935, %v886
    %v1181 = vpack.c.b16 %v936, %v887
    %v1182 = vpack.c.b16 %v937, %v888
    %v1183 = vpack.c.b16 %v938, %v889
    %v1184 = vpack.c.b16 %v939, %v890
    %v1185 = vpack.c.b16 %v940, %v891
    %v1186 = vpack.c.b16 %v941, %v892
    %v1187 = vpack.c.b16 %v942, %v893
    %v1188 = vpack.c.b16 %v943, %v894
    %v1189 = vpack.c.b16 %v944, %v895
    %v1190 = vpack.c.b16 %v945, %v896
    %v1191 = vpack.c.b16 %v946, %v897
    %v1192 = vpack.c.b16 %v947, %v898
    %v1193 = vpack.c.b16 %v948, %v899
    %v1194 = vpack.c.b16 %v949, %v900
    %v1195 = vpack.c.b16 %v950, %v901
    %v1196 = vpack.c.b16 %v1000, %v951
    %v1197 = vpack.c.b16 %v1001, %v952
    %v1198 = vpack.c.b16 %v1002, %v953
    %v1199 = vpack.c.b16 %v1003, %v954
    %v1200 = vpack.c.b16 %v1004, %v955
    %v1201 = vpack.c.b16 %v1005, %v956
    %v1202 = vpack.c.b16 %v1006, %v957
    %v1203 = vpack.c.b16 %v1007, %v958
    %v1204 = vpack.c.b16 %v1008, %v959
    %v1205 = vpack.c.b16 %v1009, %v960
    %v1206 = vpack.c.b16 %v1010, %v961
    %v1207 = vpack.c.b16 %v1011, %v962
    %v1208 = vpack.c.b16 %v1012, %v963
    %v1209 = vpack.c.b16 %v1013, %v964
    %v1210 = vpack.c.b16 %v1014, %v965
    %v1211 = vpack.c.b16 %v1015, %v966
    %v1212 = vpack.c.b16 %v1016, %v967
    %v1213 = vpack.c.b16 %v1017, %v968
    %v1214 = vpack.c.b16 %v1018, %v969
    %v1215 = vpack.c.b16 %v1019, %v970
    %v1216 = vpack.c.b16 %v1020, %v971
    %v1217 = vpack.c.b16 %v1021, %v972
    %v1218 = vpack.c.b16 %v1022, %v973
    %v1219 = vpack.c.b16 %v1023, %v974
    %v1220 = vpack.c.b16 %v1024, %v975
    %v1221 = vpack.c.b16 %v1025, %v976
    %v1222 = vpack.c.b16 %v1026, %v977
    %v1223 = vpack.c.b16 %v1027, %v978
    %v1224 = vpack.c.b16 %v1028, %v979
    %v1225 = vpack.c.b16 %v1029, %v980
    %v1226 = vpack.c.b16 %v1030, %v981
    %v1227 = vpack.c.b16 %v1031, %v982
    %v1228 = vpack.c.b16 %v1032, %v983
    %v1229 = vpack.c.b16 %v1033, %v984
    %v1230 = vpack.c.b16 %v1034, %v985
    %v1231 = vpack.c.b16 %v1035, %v986
    %v1232 = vpack.c.b16 %v1036, %v987
    %v1233 = vpack.c.b16 %v1037, %v988
    %v1234 = vpack.c.b16 %v1038, %v989
    %v1235 = vpack.c.b16 %v1039, %v990
    %v1236 = vpack.c.b16 %v1040, %v991
    %v1237 = vpack.c.b16 %v1041, %v992
    %v1238 = vpack.c.b16 %v1042, %v993
    %v1239 = vpack.c.b16 %v1043, %v994
    %v1240 = vpack.c.b16 %v1044, %v995
    %v1241 = vpack.c.b16 %v1045, %v996
    %v1242 = vpack.c.b16 %v1046, %v997
    %v1243 = vpack.c.b16 %v1047, %v998
    %v1244 = vpack.c.b16 %v1048, %v999
    %1441 = vmatpush.bf16.xpose.msra.mxu0 0
    %1442 = vmatpush.bf16.xpose.msra.mxu0 0
    %1443 = vmatpush.bf16.xpose.msra.mxu0 0
    %1444 = vmatpush.bf16.xpose.msra.mxu0 0
    %1445 = vmatpush.bf16.xpose.msra.mxu0 %v1196
    %1446 = vmatpush.bf16.xpose.msra.mxu0 %v1147
    %1447 = vmatpush.bf16.xpose.msra.mxu0 %v1098
    %1448 = vmatpush.bf16.xpose.msra.mxu0 %v1049
    %1449 = vmatmul.bf16.gmra.mxu0 %v204
    %v1450 = vpop.f32.mrf.mxu0
    %v1451 = vadd.f32 %v455, %v1450
    %v1452 = vpop.f32.mrf.mxu0
    %1453 = vdwg.mxu0
    %1454 = vmatpush.bf16.xpose.msra.mxu0 0
    %1455 = vmatpush.bf16.xpose.msra.mxu0 0
    %1456 = vmatpush.bf16.xpose.msra.mxu0 0
    %1457 = vmatpush.bf16.xpose.msra.mxu0 0
    %1458 = vmatpush.bf16.xpose.msra.mxu0 %v1197
    %1459 = vmatpush.bf16.xpose.msra.mxu0 %v1148
    %1460 = vmatpush.bf16.xpose.msra.mxu0 %v1099
    %1461 = vmatpush.bf16.xpose.msra.mxu0 %v1050
    %1462 = vmatmul.bf16.gmra.mxu0 %v205
    %v1463 = vpop.f32.mrf.mxu0
    %v1464 = vadd.f32 %v1451, %v1463
    %v1465 = vpop.f32.mrf.mxu0
    %1466 = vdwg.mxu0
    %1467 = vmatpush.bf16.xpose.msra.mxu0 0
    %1468 = vmatpush.bf16.xpose.msra.mxu0 0
    %1469 = vmatpush.bf16.xpose.msra.mxu0 0
    %1470 = vmatpush.bf16.xpose.msra.mxu0 0
    %1471 = vmatpush.bf16.xpose.msra.mxu0 %v1198
    %1472 = vmatpush.bf16.xpose.msra.mxu0 %v1149
    %1473 = vmatpush.bf16.xpose.msra.mxu0 %v1100
    %1474 = vmatpush.bf16.xpose.msra.mxu0 %v1051
    %1475 = vmatmul.bf16.gmra.mxu0 %v206
    %v1476 = vpop.f32.mrf.mxu0
    %v1477 = vadd.f32 %v1464, %v1476
    %v1478 = vpop.f32.mrf.mxu0
    %1479 = vdwg.mxu0
    %1480 = vmatpush.bf16.xpose.msra.mxu0 0
    %1481 = vmatpush.bf16.xpose.msra.mxu0 0
    %1482 = vmatpush.bf16.xpose.msra.mxu0 0
    %1483 = vmatpush.bf16.xpose.msra.mxu0 0
    %1484 = vmatpush.bf16.xpose.msra.mxu0 %v1199
    %1485 = vmatpush.bf16.xpose.msra.mxu0 %v1150
    %1486 = vmatpush.bf16.xpose.msra.mxu0 %v1101
    %1487 = vmatpush.bf16.xpose.msra.mxu0 %v1052
    %1488 = vmatmul.bf16.gmra.mxu0 %v207
    %v1489 = vpop.f32.mrf.mxu0
    %v1490 = vadd.f32 %v1477, %v1489
    %v1491 = vpop.f32.mrf.mxu0
    %1492 = vdwg.mxu0
    %1493 = vmatpush.bf16.xpose.msra.mxu0 0
    %1494 = vmatpush.bf16.xpose.msra.mxu0 0
    %1495 = vmatpush.bf16.xpose.msra.mxu0 0
    %1496 = vmatpush.bf16.xpose.msra.mxu0 0
    %1497 = vmatpush.bf16.xpose.msra.mxu0 %v1200
    %1498 = vmatpush.bf16.xpose.msra.mxu0 %v1151
    %1499 = vmatpush.bf16.xpose.msra.mxu0 %v1102
    %1500 = vmatpush.bf16.xpose.msra.mxu0 %v1053
    %1501 = vmatmul.bf16.gmra.mxu0 %v208
    %v1502 = vpop.f32.mrf.mxu0
    %v1503 = vadd.f32 %v1490, %v1502
    %v1504 = vpop.f32.mrf.mxu0
    %1505 = vdwg.mxu0
    %1506 = vmatpush.bf16.xpose.msra.mxu0 0
    %1507 = vmatpush.bf16.xpose.msra.mxu0 0
    %1508 = vmatpush.bf16.xpose.msra.mxu0 0
    %1509 = vmatpush.bf16.xpose.msra.mxu0 0
    %1510 = vmatpush.bf16.xpose.msra.mxu0 %v1201
    %1511 = vmatpush.bf16.xpose.msra.mxu0 %v1152
    %1512 = vmatpush.bf16.xpose.msra.mxu0 %v1103
    %1513 = vmatpush.bf16.xpose.msra.mxu0 %v1054
    %1514 = vmatmul.bf16.gmra.mxu0 %v209
    %v1515 = vpop.f32.mrf.mxu0
    %v1516 = vadd.f32 %v1503, %v1515
    %v1517 = vpop.f32.mrf.mxu0
    %1518 = vdwg.mxu0
    %1519 = vmatpush.bf16.xpose.msra.mxu0 0
    %1520 = vmatpush.bf16.xpose.msra.mxu0 0
    %1521 = vmatpush.bf16.xpose.msra.mxu0 0
    %1522 = vmatpush.bf16.xpose.msra.mxu0 0
    %1523 = vmatpush.bf16.xpose.msra.mxu0 %v1202
    %1524 = vmatpush.bf16.xpose.msra.mxu0 %v1153
    %1525 = vmatpush.bf16.xpose.msra.mxu0 %v1104
    %1526 = vmatpush.bf16.xpose.msra.mxu0 %v1055
    %1527 = vmatmul.bf16.gmra.mxu0 %v210
    %v1528 = vpop.f32.mrf.mxu0
    %v1529 = vadd.f32 %v1516, %v1528
    %v1530 = vpop.f32.mrf.mxu0
    %1531 = vdwg.mxu0
    %1532 = vmatpush.bf16.xpose.msra.mxu0 0
    %1533 = vmatpush.bf16.xpose.msra.mxu0 0
    %1534 = vmatpush.bf16.xpose.msra.mxu0 0
    %1535 = vmatpush.bf16.xpose.msra.mxu0 0
    %1536 = vmatpush.bf16.xpose.msra.mxu0 %v1203
    %1537 = vmatpush.bf16.xpose.msra.mxu0 %v1154
    %1538 = vmatpush.bf16.xpose.msra.mxu0 %v1105
    %1539 = vmatpush.bf16.xpose.msra.mxu0 %v1056
    %1540 = vmatmul.bf16.gmra.mxu0 %v211
    %v1541 = vpop.f32.mrf.mxu0
    %v1542 = vadd.f32 %v1529, %v1541
    %v1543 = vpop.f32.mrf.mxu0
    %1544 = vdwg.mxu0
    %1545 = vmatpush.bf16.xpose.msra.mxu0 0
    %1546 = vmatpush.bf16.xpose.msra.mxu0 0
    %1547 = vmatpush.bf16.xpose.msra.mxu0 0
    %1548 = vmatpush.bf16.xpose.msra.mxu0 0
    %1549 = vmatpush.bf16.xpose.msra.mxu0 %v1204
    %1550 = vmatpush.bf16.xpose.msra.mxu0 %v1155
    %1551 = vmatpush.bf16.xpose.msra.mxu0 %v1106
    %1552 = vmatpush.bf16.xpose.msra.mxu0 %v1057
    %1553 = vmatmul.bf16.gmra.mxu0 %v212
    %v1554 = vpop.f32.mrf.mxu0
    %v1555 = vadd.f32 %v1542, %v1554
    %v1556 = vpop.f32.mrf.mxu0
    %1557 = vdwg.mxu0
    %1558 = vmatpush.bf16.xpose.msra.mxu0 0
    %1559 = vmatpush.bf16.xpose.msra.mxu0 0
    %1560 = vmatpush.bf16.xpose.msra.mxu0 0
    %1561 = vmatpush.bf16.xpose.msra.mxu0 0
    %1562 = vmatpush.bf16.xpose.msra.mxu0 %v1205
    %1563 = vmatpush.bf16.xpose.msra.mxu0 %v1156
    %1564 = vmatpush.bf16.xpose.msra.mxu0 %v1107
    %1565 = vmatpush.bf16.xpose.msra.mxu0 %v1058
    %1566 = vmatmul.bf16.gmra.mxu0 %v213
    %v1567 = vpop.f32.mrf.mxu0
    %v1568 = vadd.f32 %v1555, %v1567
    %v1569 = vpop.f32.mrf.mxu0
    %1570 = vdwg.mxu0
    %1571 = vmatpush.bf16.xpose.msra.mxu0 0
    %1572 = vmatpush.bf16.xpose.msra.mxu0 0
    %1573 = vmatpush.bf16.xpose.msra.mxu0 0
    %1574 = vmatpush.bf16.xpose.msra.mxu0 0
    %1575 = vmatpush.bf16.xpose.msra.mxu0 %v1206
    %1576 = vmatpush.bf16.xpose.msra.mxu0 %v1157
    %1577 = vmatpush.bf16.xpose.msra.mxu0 %v1108
    %1578 = vmatpush.bf16.xpose.msra.mxu0 %v1059
    %1579 = vmatmul.bf16.gmra.mxu0 %v214
    %v1580 = vpop.f32.mrf.mxu0
    %v1581 = vadd.f32 %v1568, %v1580
    %v1582 = vpop.f32.mrf.mxu0
    %1583 = vdwg.mxu0
    %1584 = vmatpush.bf16.xpose.msra.mxu0 0
    %1585 = vmatpush.bf16.xpose.msra.mxu0 0
    %1586 = vmatpush.bf16.xpose.msra.mxu0 0
    %1587 = vmatpush.bf16.xpose.msra.mxu0 0
    %1588 = vmatpush.bf16.xpose.msra.mxu0 %v1207
    %1589 = vmatpush.bf16.xpose.msra.mxu0 %v1158
    %1590 = vmatpush.bf16.xpose.msra.mxu0 %v1109
    %1591 = vmatpush.bf16.xpose.msra.mxu0 %v1060
    %1592 = vmatmul.bf16.gmra.mxu0 %v215
    %v1593 = vpop.f32.mrf.mxu0
    %v1594 = vadd.f32 %v1581, %v1593
    %v1595 = vpop.f32.mrf.mxu0
    %1596 = vdwg.mxu0
    %1597 = vmatpush.bf16.xpose.msra.mxu0 0
    %1598 = vmatpush.bf16.xpose.msra.mxu0 0
    %1599 = vmatpush.bf16.xpose.msra.mxu0 0
    %1600 = vmatpush.bf16.xpose.msra.mxu0 0
    %1601 = vmatpush.bf16.xpose.msra.mxu0 %v1208
    %1602 = vmatpush.bf16.xpose.msra.mxu0 %v1159
    %1603 = vmatpush.bf16.xpose.msra.mxu0 %v1110
    %1604 = vmatpush.bf16.xpose.msra.mxu0 %v1061
    %1605 = vmatmul.bf16.gmra.mxu0 %v216
    %v1606 = vpop.f32.mrf.mxu0
    %v1607 = vadd.f32 %v1594, %v1606
    %v1608 = vpop.f32.mrf.mxu0
    %1609 = vdwg.mxu0
    %1610 = vmatpush.bf16.xpose.msra.mxu0 0
    %1611 = vmatpush.bf16.xpose.msra.mxu0 0
    %1612 = vmatpush.bf16.xpose.msra.mxu0 0
    %1613 = vmatpush.bf16.xpose.msra.mxu0 0
    %1614 = vmatpush.bf16.xpose.msra.mxu0 %v1209
    %1615 = vmatpush.bf16.xpose.msra.mxu0 %v1160
    %1616 = vmatpush.bf16.xpose.msra.mxu0 %v1111
    %1617 = vmatpush.bf16.xpose.msra.mxu0 %v1062
    %1618 = vmatmul.bf16.gmra.mxu0 %v217
    %v1619 = vpop.f32.mrf.mxu0
    %v1620 = vadd.f32 %v1607, %v1619
    %v1621 = vpop.f32.mrf.mxu0
    %1622 = vdwg.mxu0
    %1623 = vmatpush.bf16.xpose.msra.mxu0 0
    %1624 = vmatpush.bf16.xpose.msra.mxu0 0
    %1625 = vmatpush.bf16.xpose.msra.mxu0 0
    %1626 = vmatpush.bf16.xpose.msra.mxu0 0
    %1627 = vmatpush.bf16.xpose.msra.mxu0 %v1210
    %1628 = vmatpush.bf16.xpose.msra.mxu0 %v1161
    %1629 = vmatpush.bf16.xpose.msra.mxu0 %v1112
    %1630 = vmatpush.bf16.xpose.msra.mxu0 %v1063
    %1631 = vmatmul.bf16.gmra.mxu0 %v218
    %v1632 = vpop.f32.mrf.mxu0
    %v1633 = vadd.f32 %v1620, %v1632
    %v1634 = vpop.f32.mrf.mxu0
    %1635 = vdwg.mxu0
    %1636 = vmatpush.bf16.xpose.msra.mxu0 0
    %1637 = vmatpush.bf16.xpose.msra.mxu0 0
    %1638 = vmatpush.bf16.xpose.msra.mxu0 0
    %1639 = vmatpush.bf16.xpose.msra.mxu0 0
    %1640 = vmatpush.bf16.xpose.msra.mxu0 %v1211
    %1641 = vmatpush.bf16.xpose.msra.mxu0 %v1162
    %1642 = vmatpush.bf16.xpose.msra.mxu0 %v1113
    %1643 = vmatpush.bf16.xpose.msra.mxu0 %v1064
    %1644 = vmatmul.bf16.gmra.mxu0 %v219
    %v1645 = vpop.f32.mrf.mxu0
    %v1646 = vadd.f32 %v1633, %v1645
    %v1647 = vpop.f32.mrf.mxu0
    %1648 = vdwg.mxu0
    %1649 = vmatpush.bf16.xpose.msra.mxu0 0
    %1650 = vmatpush.bf16.xpose.msra.mxu0 0
    %1651 = vmatpush.bf16.xpose.msra.mxu0 0
    %1652 = vmatpush.bf16.xpose.msra.mxu0 0
    %1653 = vmatpush.bf16.xpose.msra.mxu0 %v1212
    %1654 = vmatpush.bf16.xpose.msra.mxu0 %v1163
    %1655 = vmatpush.bf16.xpose.msra.mxu0 %v1114
    %1656 = vmatpush.bf16.xpose.msra.mxu0 %v1065
    %1657 = vmatmul.bf16.gmra.mxu0 %v220
    %v1658 = vpop.f32.mrf.mxu0
    %v1659 = vadd.f32 %v1646, %v1658
    %v1660 = vpop.f32.mrf.mxu0
    %1661 = vdwg.mxu0
    %1662 = vmatpush.bf16.xpose.msra.mxu0 0
    %1663 = vmatpush.bf16.xpose.msra.mxu0 0
    %1664 = vmatpush.bf16.xpose.msra.mxu0 0
    %1665 = vmatpush.bf16.xpose.msra.mxu0 0
    %1666 = vmatpush.bf16.xpose.msra.mxu0 %v1213
    %1667 = vmatpush.bf16.xpose.msra.mxu0 %v1164
    %1668 = vmatpush.bf16.xpose.msra.mxu0 %v1115
    %1669 = vmatpush.bf16.xpose.msra.mxu0 %v1066
    %1670 = vmatmul.bf16.gmra.mxu0 %v221
    %v1671 = vpop.f32.mrf.mxu0
    %v1672 = vadd.f32 %v1659, %v1671
    %v1673 = vpop.f32.mrf.mxu0
    %1674 = vdwg.mxu0
    %1675 = vmatpush.bf16.xpose.msra.mxu0 0
    %1676 = vmatpush.bf16.xpose.msra.mxu0 0
    %1677 = vmatpush.bf16.xpose.msra.mxu0 0
    %1678 = vmatpush.bf16.xpose.msra.mxu0 0
    %1679 = vmatpush.bf16.xpose.msra.mxu0 %v1214
    %1680 = vmatpush.bf16.xpose.msra.mxu0 %v1165
    %1681 = vmatpush.bf16.xpose.msra.mxu0 %v1116
    %1682 = vmatpush.bf16.xpose.msra.mxu0 %v1067
    %1683 = vmatmul.bf16.gmra.mxu0 %v222
    %v1684 = vpop.f32.mrf.mxu0
    %v1685 = vadd.f32 %v1672, %v1684
    %v1686 = vpop.f32.mrf.mxu0
    %1687 = vdwg.mxu0
    %1688 = vmatpush.bf16.xpose.msra.mxu0 0
    %1689 = vmatpush.bf16.xpose.msra.mxu0 0
    %1690 = vmatpush.bf16.xpose.msra.mxu0 0
    %1691 = vmatpush.bf16.xpose.msra.mxu0 0
    %1692 = vmatpush.bf16.xpose.msra.mxu0 %v1215
    %1693 = vmatpush.bf16.xpose.msra.mxu0 %v1166
    %1694 = vmatpush.bf16.xpose.msra.mxu0 %v1117
    %1695 = vmatpush.bf16.xpose.msra.mxu0 %v1068
    %1696 = vmatmul.bf16.gmra.mxu0 %v223
    %v1697 = vpop.f32.mrf.mxu0
    %v1698 = vadd.f32 %v1685, %v1697
    %v1699 = vpop.f32.mrf.mxu0
    %1700 = vdwg.mxu0
    %1701 = vmatpush.bf16.xpose.msra.mxu0 0
    %1702 = vmatpush.bf16.xpose.msra.mxu0 0
    %1703 = vmatpush.bf16.xpose.msra.mxu0 0
    %1704 = vmatpush.bf16.xpose.msra.mxu0 0
    %1705 = vmatpush.bf16.xpose.msra.mxu0 %v1216
    %1706 = vmatpush.bf16.xpose.msra.mxu0 %v1167
    %1707 = vmatpush.bf16.xpose.msra.mxu0 %v1118
    %1708 = vmatpush.bf16.xpose.msra.mxu0 %v1069
    %1709 = vmatmul.bf16.gmra.mxu0 %v224
    %v1710 = vpop.f32.mrf.mxu0
    %v1711 = vadd.f32 %v1698, %v1710
    %v1712 = vpop.f32.mrf.mxu0
    %1713 = vdwg.mxu0
    %1714 = vmatpush.bf16.xpose.msra.mxu0 0
    %1715 = vmatpush.bf16.xpose.msra.mxu0 0
    %1716 = vmatpush.bf16.xpose.msra.mxu0 0
    %1717 = vmatpush.bf16.xpose.msra.mxu0 0
    %1718 = vmatpush.bf16.xpose.msra.mxu0 %v1217
    %1719 = vmatpush.bf16.xpose.msra.mxu0 %v1168
    %1720 = vmatpush.bf16.xpose.msra.mxu0 %v1119
    %1721 = vmatpush.bf16.xpose.msra.mxu0 %v1070
    %1722 = vmatmul.bf16.gmra.mxu0 %v225
    %v1723 = vpop.f32.mrf.mxu0
    %v1724 = vadd.f32 %v1711, %v1723
    %v1725 = vpop.f32.mrf.mxu0
    %1726 = vdwg.mxu0
    %1727 = vmatpush.bf16.xpose.msra.mxu0 0
    %1728 = vmatpush.bf16.xpose.msra.mxu0 0
    %1729 = vmatpush.bf16.xpose.msra.mxu0 0
    %1730 = vmatpush.bf16.xpose.msra.mxu0 0
    %1731 = vmatpush.bf16.xpose.msra.mxu0 %v1218
    %1732 = vmatpush.bf16.xpose.msra.mxu0 %v1169
    %1733 = vmatpush.bf16.xpose.msra.mxu0 %v1120
    %1734 = vmatpush.bf16.xpose.msra.mxu0 %v1071
    %1735 = vmatmul.bf16.gmra.mxu0 %v226
    %v1736 = vpop.f32.mrf.mxu0
    %v1737 = vadd.f32 %v1724, %v1736
    %v1738 = vpop.f32.mrf.mxu0
    %1739 = vdwg.mxu0
    %1740 = vmatpush.bf16.xpose.msra.mxu0 0
    %1741 = vmatpush.bf16.xpose.msra.mxu0 0
    %1742 = vmatpush.bf16.xpose.msra.mxu0 0
    %1743 = vmatpush.bf16.xpose.msra.mxu0 0
    %1744 = vmatpush.bf16.xpose.msra.mxu0 %v1219
    %1745 = vmatpush.bf16.xpose.msra.mxu0 %v1170
    %1746 = vmatpush.bf16.xpose.msra.mxu0 %v1121
    %1747 = vmatpush.bf16.xpose.msra.mxu0 %v1072
    %1748 = vmatmul.bf16.gmra.mxu0 %v227
    %v1749 = vpop.f32.mrf.mxu0
    %v1750 = vadd.f32 %v1737, %v1749
    %v1751 = vpop.f32.mrf.mxu0
    %1752 = vdwg.mxu0
    %1753 = vmatpush.bf16.xpose.msra.mxu0 0
    %1754 = vmatpush.bf16.xpose.msra.mxu0 0
    %1755 = vmatpush.bf16.xpose.msra.mxu0 0
    %1756 = vmatpush.bf16.xpose.msra.mxu0 0
    %1757 = vmatpush.bf16.xpose.msra.mxu0 %v1220
    %1758 = vmatpush.bf16.xpose.msra.mxu0 %v1171
    %1759 = vmatpush.bf16.xpose.msra.mxu0 %v1122
    %1760 = vmatpush.bf16.xpose.msra.mxu0 %v1073
    %1761 = vmatmul.bf16.gmra.mxu0 %v228
    %v1762 = vpop.f32.mrf.mxu0
    %v1763 = vadd.f32 %v1750, %v1762
    %v1764 = vpop.f32.mrf.mxu0
    %1765 = vdwg.mxu0
    %1766 = vmatpush.bf16.xpose.msra.mxu0 0
    %1767 = vmatpush.bf16.xpose.msra.mxu0 0
    %1768 = vmatpush.bf16.xpose.msra.mxu0 0
    %1769 = vmatpush.bf16.xpose.msra.mxu0 0
    %1770 = vmatpush.bf16.xpose.msra.mxu0 %v1221
    %1771 = vmatpush.bf16.xpose.msra.mxu0 %v1172
    %1772 = vmatpush.bf16.xpose.msra.mxu0 %v1123
    %1773 = vmatpush.bf16.xpose.msra.mxu0 %v1074
    %1774 = vmatmul.bf16.gmra.mxu0 %v229
    %v1775 = vpop.f32.mrf.mxu0
    %v1776 = vadd.f32 %v1763, %v1775
    %v1777 = vpop.f32.mrf.mxu0
    %1778 = vdwg.mxu0
    %1779 = vmatpush.bf16.xpose.msra.mxu0 0
    %1780 = vmatpush.bf16.xpose.msra.mxu0 0
    %1781 = vmatpush.bf16.xpose.msra.mxu0 0
    %1782 = vmatpush.bf16.xpose.msra.mxu0 0
    %1783 = vmatpush.bf16.xpose.msra.mxu0 %v1222
    %1784 = vmatpush.bf16.xpose.msra.mxu0 %v1173
    %1785 = vmatpush.bf16.xpose.msra.mxu0 %v1124
    %1786 = vmatpush.bf16.xpose.msra.mxu0 %v1075
    %1787 = vmatmul.bf16.gmra.mxu0 %v230
    %v1788 = vpop.f32.mrf.mxu0
    %v1789 = vadd.f32 %v1776, %v1788
    %v1790 = vpop.f32.mrf.mxu0
    %1791 = vdwg.mxu0
    %1792 = vmatpush.bf16.xpose.msra.mxu0 0
    %1793 = vmatpush.bf16.xpose.msra.mxu0 0
    %1794 = vmatpush.bf16.xpose.msra.mxu0 0
    %1795 = vmatpush.bf16.xpose.msra.mxu0 0
    %1796 = vmatpush.bf16.xpose.msra.mxu0 %v1223
    %1797 = vmatpush.bf16.xpose.msra.mxu0 %v1174
    %1798 = vmatpush.bf16.xpose.msra.mxu0 %v1125
    %1799 = vmatpush.bf16.xpose.msra.mxu0 %v1076
    %1800 = vmatmul.bf16.gmra.mxu0 %v231
    %v1801 = vpop.f32.mrf.mxu0
    %v1802 = vadd.f32 %v1789, %v1801
    %v1803 = vpop.f32.mrf.mxu0
    %1804 = vdwg.mxu0
    %1805 = vmatpush.bf16.xpose.msra.mxu0 0
    %1806 = vmatpush.bf16.xpose.msra.mxu0 0
    %1807 = vmatpush.bf16.xpose.msra.mxu0 0
    %1808 = vmatpush.bf16.xpose.msra.mxu0 0
    %1809 = vmatpush.bf16.xpose.msra.mxu0 %v1224
    %1810 = vmatpush.bf16.xpose.msra.mxu0 %v1175
    %1811 = vmatpush.bf16.xpose.msra.mxu0 %v1126
    %1812 = vmatpush.bf16.xpose.msra.mxu0 %v1077
    %1813 = vmatmul.bf16.gmra.mxu0 %v232
    %v1814 = vpop.f32.mrf.mxu0
    %v1815 = vadd.f32 %v1802, %v1814
    %v1816 = vpop.f32.mrf.mxu0
    %1817 = vdwg.mxu0
    %1818 = vmatpush.bf16.xpose.msra.mxu0 0
    %1819 = vmatpush.bf16.xpose.msra.mxu0 0
    %1820 = vmatpush.bf16.xpose.msra.mxu0 0
    %1821 = vmatpush.bf16.xpose.msra.mxu0 0
    %1822 = vmatpush.bf16.xpose.msra.mxu0 %v1225
    %1823 = vmatpush.bf16.xpose.msra.mxu0 %v1176
    %1824 = vmatpush.bf16.xpose.msra.mxu0 %v1127
    %1825 = vmatpush.bf16.xpose.msra.mxu0 %v1078
    %1826 = vmatmul.bf16.gmra.mxu0 %v233
    %v1827 = vpop.f32.mrf.mxu0
    %v1828 = vadd.f32 %v1815, %v1827
    %v1829 = vpop.f32.mrf.mxu0
    %1830 = vdwg.mxu0
    %1831 = vmatpush.bf16.xpose.msra.mxu0 0
    %1832 = vmatpush.bf16.xpose.msra.mxu0 0
    %1833 = vmatpush.bf16.xpose.msra.mxu0 0
    %1834 = vmatpush.bf16.xpose.msra.mxu0 0
    %1835 = vmatpush.bf16.xpose.msra.mxu0 %v1226
    %1836 = vmatpush.bf16.xpose.msra.mxu0 %v1177
    %1837 = vmatpush.bf16.xpose.msra.mxu0 %v1128
    %1838 = vmatpush.bf16.xpose.msra.mxu0 %v1079
    %1839 = vmatmul.bf16.gmra.mxu0 %v234
    %v1840 = vpop.f32.mrf.mxu0
    %v1841 = vadd.f32 %v1828, %v1840
    %v1842 = vpop.f32.mrf.mxu0
    %1843 = vdwg.mxu0
    %1844 = vmatpush.bf16.xpose.msra.mxu0 0
    %1845 = vmatpush.bf16.xpose.msra.mxu0 0
    %1846 = vmatpush.bf16.xpose.msra.mxu0 0
    %1847 = vmatpush.bf16.xpose.msra.mxu0 0
    %1848 = vmatpush.bf16.xpose.msra.mxu0 %v1227
    %1849 = vmatpush.bf16.xpose.msra.mxu0 %v1178
    %1850 = vmatpush.bf16.xpose.msra.mxu0 %v1129
    %1851 = vmatpush.bf16.xpose.msra.mxu0 %v1080
    %1852 = vmatmul.bf16.gmra.mxu0 %v235
    %v1853 = vpop.f32.mrf.mxu0
    %v1854 = vadd.f32 %v1841, %v1853
    %v1855 = vpop.f32.mrf.mxu0
    %1856 = vdwg.mxu0
    %1857 = vmatpush.bf16.xpose.msra.mxu0 0
    %1858 = vmatpush.bf16.xpose.msra.mxu0 0
    %1859 = vmatpush.bf16.xpose.msra.mxu0 0
    %1860 = vmatpush.bf16.xpose.msra.mxu0 0
    %1861 = vmatpush.bf16.xpose.msra.mxu0 %v1228
    %1862 = vmatpush.bf16.xpose.msra.mxu0 %v1179
    %1863 = vmatpush.bf16.xpose.msra.mxu0 %v1130
    %1864 = vmatpush.bf16.xpose.msra.mxu0 %v1081
    %1865 = vmatmul.bf16.gmra.mxu0 %v236
    %v1866 = vpop.f32.mrf.mxu0
    %v1867 = vadd.f32 %v1854, %v1866
    %v1868 = vpop.f32.mrf.mxu0
    %1869 = vdwg.mxu0
    %1870 = vmatpush.bf16.xpose.msra.mxu0 0
    %1871 = vmatpush.bf16.xpose.msra.mxu0 0
    %1872 = vmatpush.bf16.xpose.msra.mxu0 0
    %1873 = vmatpush.bf16.xpose.msra.mxu0 0
    %1874 = vmatpush.bf16.xpose.msra.mxu0 %v1229
    %1875 = vmatpush.bf16.xpose.msra.mxu0 %v1180
    %1876 = vmatpush.bf16.xpose.msra.mxu0 %v1131
    %1877 = vmatpush.bf16.xpose.msra.mxu0 %v1082
    %1878 = vmatmul.bf16.gmra.mxu0 %v237
    %v1879 = vpop.f32.mrf.mxu0
    %v1880 = vadd.f32 %v1867, %v1879
    %v1881 = vpop.f32.mrf.mxu0
    %1882 = vdwg.mxu0
    %1883 = vmatpush.bf16.xpose.msra.mxu0 0
    %1884 = vmatpush.bf16.xpose.msra.mxu0 0
    %1885 = vmatpush.bf16.xpose.msra.mxu0 0
    %1886 = vmatpush.bf16.xpose.msra.mxu0 0
    %1887 = vmatpush.bf16.xpose.msra.mxu0 %v1230
    %1888 = vmatpush.bf16.xpose.msra.mxu0 %v1181
    %1889 = vmatpush.bf16.xpose.msra.mxu0 %v1132
    %1890 = vmatpush.bf16.xpose.msra.mxu0 %v1083
    %1891 = vmatmul.bf16.gmra.mxu0 %v238
    %v1892 = vpop.f32.mrf.mxu0
    %v1893 = vadd.f32 %v1880, %v1892
    %v1894 = vpop.f32.mrf.mxu0
    %1895 = vdwg.mxu0
    %1896 = vmatpush.bf16.xpose.msra.mxu0 0
    %1897 = vmatpush.bf16.xpose.msra.mxu0 0
    %1898 = vmatpush.bf16.xpose.msra.mxu0 0
    %1899 = vmatpush.bf16.xpose.msra.mxu0 0
    %1900 = vmatpush.bf16.xpose.msra.mxu0 %v1231
    %1901 = vmatpush.bf16.xpose.msra.mxu0 %v1182
    %1902 = vmatpush.bf16.xpose.msra.mxu0 %v1133
    %1903 = vmatpush.bf16.xpose.msra.mxu0 %v1084
    %1904 = vmatmul.bf16.gmra.mxu0 %v239
    %v1905 = vpop.f32.mrf.mxu0
    %v1906 = vadd.f32 %v1893, %v1905
    %v1907 = vpop.f32.mrf.mxu0
    %1908 = vdwg.mxu0
    %1909 = vmatpush.bf16.xpose.msra.mxu0 0
    %1910 = vmatpush.bf16.xpose.msra.mxu0 0
    %1911 = vmatpush.bf16.xpose.msra.mxu0 0
    %1912 = vmatpush.bf16.xpose.msra.mxu0 0
    %1913 = vmatpush.bf16.xpose.msra.mxu0 %v1232
    %1914 = vmatpush.bf16.xpose.msra.mxu0 %v1183
    %1915 = vmatpush.bf16.xpose.msra.mxu0 %v1134
    %1916 = vmatpush.bf16.xpose.msra.mxu0 %v1085
    %1917 = vmatmul.bf16.gmra.mxu0 %v240
    %v1918 = vpop.f32.mrf.mxu0
    %v1919 = vadd.f32 %v1906, %v1918
    %v1920 = vpop.f32.mrf.mxu0
    %1921 = vdwg.mxu0
    %1922 = vmatpush.bf16.xpose.msra.mxu0 0
    %1923 = vmatpush.bf16.xpose.msra.mxu0 0
    %1924 = vmatpush.bf16.xpose.msra.mxu0 0
    %1925 = vmatpush.bf16.xpose.msra.mxu0 0
    %1926 = vmatpush.bf16.xpose.msra.mxu0 %v1233
    %1927 = vmatpush.bf16.xpose.msra.mxu0 %v1184
    %1928 = vmatpush.bf16.xpose.msra.mxu0 %v1135
    %1929 = vmatpush.bf16.xpose.msra.mxu0 %v1086
    %1930 = vmatmul.bf16.gmra.mxu0 %v241
    %v1931 = vpop.f32.mrf.mxu0
    %v1932 = vadd.f32 %v1919, %v1931
    %v1933 = vpop.f32.mrf.mxu0
    %1934 = vdwg.mxu0
    %1935 = vmatpush.bf16.xpose.msra.mxu0 0
    %1936 = vmatpush.bf16.xpose.msra.mxu0 0
    %1937 = vmatpush.bf16.xpose.msra.mxu0 0
    %1938 = vmatpush.bf16.xpose.msra.mxu0 0
    %1939 = vmatpush.bf16.xpose.msra.mxu0 %v1234
    %1940 = vmatpush.bf16.xpose.msra.mxu0 %v1185
    %1941 = vmatpush.bf16.xpose.msra.mxu0 %v1136
    %1942 = vmatpush.bf16.xpose.msra.mxu0 %v1087
    %1943 = vmatmul.bf16.gmra.mxu0 %v242
    %v1944 = vpop.f32.mrf.mxu0
    %v1945 = vadd.f32 %v1932, %v1944
    %v1946 = vpop.f32.mrf.mxu0
    %1947 = vdwg.mxu0
    %1948 = vmatpush.bf16.xpose.msra.mxu0 0
    %1949 = vmatpush.bf16.xpose.msra.mxu0 0
    %1950 = vmatpush.bf16.xpose.msra.mxu0 0
    %1951 = vmatpush.bf16.xpose.msra.mxu0 0
    %1952 = vmatpush.bf16.xpose.msra.mxu0 %v1235
    %1953 = vmatpush.bf16.xpose.msra.mxu0 %v1186
    %1954 = vmatpush.bf16.xpose.msra.mxu0 %v1137
    %1955 = vmatpush.bf16.xpose.msra.mxu0 %v1088
    %1956 = vmatmul.bf16.gmra.mxu0 %v243
    %v1957 = vpop.f32.mrf.mxu0
    %v1958 = vadd.f32 %v1945, %v1957
    %v1959 = vpop.f32.mrf.mxu0
    %1960 = vdwg.mxu0
    %1961 = vmatpush.bf16.xpose.msra.mxu0 0
    %1962 = vmatpush.bf16.xpose.msra.mxu0 0
    %1963 = vmatpush.bf16.xpose.msra.mxu0 0
    %1964 = vmatpush.bf16.xpose.msra.mxu0 0
    %1965 = vmatpush.bf16.xpose.msra.mxu0 %v1236
    %1966 = vmatpush.bf16.xpose.msra.mxu0 %v1187
    %1967 = vmatpush.bf16.xpose.msra.mxu0 %v1138
    %1968 = vmatpush.bf16.xpose.msra.mxu0 %v1089
    %1969 = vmatmul.bf16.gmra.mxu0 %v244
    %v1970 = vpop.f32.mrf.mxu0
    %v1971 = vadd.f32 %v1958, %v1970
    %v1972 = vpop.f32.mrf.mxu0
    %1973 = vdwg.mxu0
    %1974 = vmatpush.bf16.xpose.msra.mxu0 0
    %1975 = vmatpush.bf16.xpose.msra.mxu0 0
    %1976 = vmatpush.bf16.xpose.msra.mxu0 0
    %1977 = vmatpush.bf16.xpose.msra.mxu0 0
    %1978 = vmatpush.bf16.xpose.msra.mxu0 %v1237
    %1979 = vmatpush.bf16.xpose.msra.mxu0 %v1188
    %1980 = vmatpush.bf16.xpose.msra.mxu0 %v1139
    %1981 = vmatpush.bf16.xpose.msra.mxu0 %v1090
    %1982 = vmatmul.bf16.gmra.mxu0 %v245
    %v1983 = vpop.f32.mrf.mxu0
    %v1984 = vadd.f32 %v1971, %v1983
    %v1985 = vpop.f32.mrf.mxu0
    %1986 = vdwg.mxu0
    %1987 = vmatpush.bf16.xpose.msra.mxu0 0
    %1988 = vmatpush.bf16.xpose.msra.mxu0 0
    %1989 = vmatpush.bf16.xpose.msra.mxu0 0
    %1990 = vmatpush.bf16.xpose.msra.mxu0 0
    %1991 = vmatpush.bf16.xpose.msra.mxu0 %v1238
    %1992 = vmatpush.bf16.xpose.msra.mxu0 %v1189
    %1993 = vmatpush.bf16.xpose.msra.mxu0 %v1140
    %1994 = vmatpush.bf16.xpose.msra.mxu0 %v1091
    %1995 = vmatmul.bf16.gmra.mxu0 %v246
    %v1996 = vpop.f32.mrf.mxu0
    %v1997 = vadd.f32 %v1984, %v1996
    %v1998 = vpop.f32.mrf.mxu0
    %1999 = vdwg.mxu0
    %2000 = vmatpush.bf16.xpose.msra.mxu0 0
    %2001 = vmatpush.bf16.xpose.msra.mxu0 0
    %2002 = vmatpush.bf16.xpose.msra.mxu0 0
    %2003 = vmatpush.bf16.xpose.msra.mxu0 0
    %2004 = vmatpush.bf16.xpose.msra.mxu0 %v1239
    %2005 = vmatpush.bf16.xpose.msra.mxu0 %v1190
    %2006 = vmatpush.bf16.xpose.msra.mxu0 %v1141
    %2007 = vmatpush.bf16.xpose.msra.mxu0 %v1092
    %2008 = vmatmul.bf16.gmra.mxu0 %v247
    %v2009 = vpop.f32.mrf.mxu0
    %v2010 = vadd.f32 %v1997, %v2009
    %v2011 = vpop.f32.mrf.mxu0
    %2012 = vdwg.mxu0
    %2013 = vmatpush.bf16.xpose.msra.mxu0 0
    %2014 = vmatpush.bf16.xpose.msra.mxu0 0
    %2015 = vmatpush.bf16.xpose.msra.mxu0 0
    %2016 = vmatpush.bf16.xpose.msra.mxu0 0
    %2017 = vmatpush.bf16.xpose.msra.mxu0 %v1240
    %2018 = vmatpush.bf16.xpose.msra.mxu0 %v1191
    %2019 = vmatpush.bf16.xpose.msra.mxu0 %v1142
    %2020 = vmatpush.bf16.xpose.msra.mxu0 %v1093
    %2021 = vmatmul.bf16.gmra.mxu0 %v248
    %v2022 = vpop.f32.mrf.mxu0
    %v2023 = vadd.f32 %v2010, %v2022
    %v2024 = vpop.f32.mrf.mxu0
    %2025 = vdwg.mxu0
    %2026 = vmatpush.bf16.xpose.msra.mxu0 0
    %2027 = vmatpush.bf16.xpose.msra.mxu0 0
    %2028 = vmatpush.bf16.xpose.msra.mxu0 0
    %2029 = vmatpush.bf16.xpose.msra.mxu0 0
    %2030 = vmatpush.bf16.xpose.msra.mxu0 %v1241
    %2031 = vmatpush.bf16.xpose.msra.mxu0 %v1192
    %2032 = vmatpush.bf16.xpose.msra.mxu0 %v1143
    %2033 = vmatpush.bf16.xpose.msra.mxu0 %v1094
    %2034 = vmatmul.bf16.gmra.mxu0 %v249
    %v2035 = vpop.f32.mrf.mxu0
    %v2036 = vadd.f32 %v2023, %v2035
    %v2037 = vpop.f32.mrf.mxu0
    %2038 = vdwg.mxu0
    %2039 = vmatpush.bf16.xpose.msra.mxu0 0
    %2040 = vmatpush.bf16.xpose.msra.mxu0 0
    %2041 = vmatpush.bf16.xpose.msra.mxu0 0
    %2042 = vmatpush.bf16.xpose.msra.mxu0 0
    %2043 = vmatpush.bf16.xpose.msra.mxu0 %v1242
    %2044 = vmatpush.bf16.xpose.msra.mxu0 %v1193
    %2045 = vmatpush.bf16.xpose.msra.mxu0 %v1144
    %2046 = vmatpush.bf16.xpose.msra.mxu0 %v1095
    %2047 = vmatmul.bf16.gmra.mxu0 %v250
    %v2048 = vpop.f32.mrf.mxu0
    %v2049 = vadd.f32 %v2036, %v2048
    %v2050 = vpop.f32.mrf.mxu0
    %2051 = vdwg.mxu0
    %2052 = vmatpush.bf16.xpose.msra.mxu0 0
    %2053 = vmatpush.bf16.xpose.msra.mxu0 0
    %2054 = vmatpush.bf16.xpose.msra.mxu0 0
    %2055 = vmatpush.bf16.xpose.msra.mxu0 0
    %2056 = vmatpush.bf16.xpose.msra.mxu0 %v1243
    %2057 = vmatpush.bf16.xpose.msra.mxu0 %v1194
    %2058 = vmatpush.bf16.xpose.msra.mxu0 %v1145
    %2059 = vmatpush.bf16.xpose.msra.mxu0 %v1096
    %2060 = vmatmul.bf16.gmra.mxu0 %v251
    %v2061 = vpop.f32.mrf.mxu0
    %v2062 = vadd.f32 %v2049, %v2061
    %v2063 = vpop.f32.mrf.mxu0
    %2064 = vdwg.mxu0
    %2065 = vmatpush.bf16.xpose.msra.mxu0 0
    %2066 = vmatpush.bf16.xpose.msra.mxu0 0
    %2067 = vmatpush.bf16.xpose.msra.mxu0 0
    %2068 = vmatpush.bf16.xpose.msra.mxu0 0
    %2069 = vmatpush.bf16.xpose.msra.mxu0 %v1244
    %2070 = vmatpush.bf16.xpose.msra.mxu0 %v1195
    %2071 = vmatpush.bf16.xpose.msra.mxu0 %v1146
    %2072 = vmatpush.bf16.xpose.msra.mxu0 %v1097
    %2073 = vmatmul.bf16.gmra.mxu0 %v252
    %v2074 = vpop.f32.mrf.mxu0
    %v2075 = vadd.f32 %v2062, %v2074
    %v2076 = vpop.f32.mrf.mxu0
    %2077 = vdwg.mxu0
    %vm2078 = vcmask 254976
    %2079 = vst.msk [vmem:[#allocation9] sm:$0x3] %vm2078, %v2075
    %2081 = vrot.lane.b32.xlu0 %v2075, 96
    %v2082 = vpop.permute.xlu0 %2081
    %2084 = vst.msk [vmem:[#allocation11] sm:$0x3] %vm2078, %v2082
    %v2085 = vmul.f32 %v2075, 0.5
    %v2086 = vmul.f32 %v2085, 1.442695
    %v2087 = vpow.pop %v2086
    %v2088 = vld [vmem:[%s3] sm:$0x3]
    %2090 = vrot.lane.b32.xlu0 %v2087, 96
    %v2091 = vpop.permute.xlu0 %2090
    %v2093 = vmul.f32 %v2088, %v2091
    %v2094 = vadd.f32 %v2093, %v2075
    %2095 = vst.msk [vmem:[#allocation8] sm:$0x3] %vm2078, %v2094
    // Predicated region
    $region30: #{tpu_custom_call.1} parent=1 // pred_check
      _
    $region31: #{tpu_custom_call.1} parent=1 // pred_check_branch
      %2097 = sbr.rel (0) target = $region33
    $region32: #{tpu_custom_call.1} parent=1 // pred_region
      %2099 = vsyncadd [#allocation4], 0
      %s2101 = sshll.u32 [#allocation8], 4
      %s2102 = int_to_ptr.vmem [resolvable:$true] %s2101
      %s2103 = sshll.u32 %s4, 4
      %s2104 = int_to_ptr.hbm [resolvable:$true] %s2103
      %2106 = dma.vmem_to_hbm [thread:$0]  %s2102, 32, %s2104, [#allocation4]
    $region33: #{tpu_custom_call.1} parent=1 // pred_fallthru
      _
    // Predicated region
    $region34: #{tpu_custom_call.1} parent=1 // pred_check
      _
    $region35: #{tpu_custom_call.1} parent=1 // pred_check_branch
      %2108 = sbr.rel (0) target = $region37
    $region36: #{tpu_custom_call.1} parent=1 // pred_region
      %2110 = vsyncadd [#allocation10], 0
      %s2112 = sshll.u32 [#allocation9], 4
      %s2113 = int_to_ptr.vmem [resolvable:$true] %s2112
      %s2114 = sshll.u32 %s5, 4
      %s2115 = int_to_ptr.hbm [resolvable:$true] %s2114
      %2117 = dma.vmem_to_hbm [thread:$0]  %s2113, 32, %s2115, [#allocation10]
    $region37: #{tpu_custom_call.1} parent=1 // pred_fallthru
      _
    // Predicated region
    $region38: #{tpu_custom_call.1} parent=1 // pred_check
      _
    $region39: #{tpu_custom_call.1} parent=1 // pred_check_branch
      %2119 = sbr.rel (0) target = $region41
    $region40: #{tpu_custom_call.1} parent=1 // pred_region
      %2121 = vsyncadd [#allocation10], 0
      %s2123 = sshll.u32 [#allocation11], 4
      %s2124 = int_to_ptr.vmem [resolvable:$true] %s2123
      %s2125 = sshll.u32 %s6, 4
      %s2126 = int_to_ptr.hbm [resolvable:$true] %s2125
      %2128 = dma.vmem_to_hbm [thread:$0]  %s2124, 32, %s2126, [#allocation10]
    $region41: #{tpu_custom_call.1} parent=1 // pred_fallthru
      _
    // Predicated region
    $region42: #{tpu_custom_call.1} parent=1 // pred_check
      _
    $region43: #{tpu_custom_call.1} parent=1 // pred_check_branch
      %2130 = sbr.rel (0) target = $region45
    $region44: #{tpu_custom_call.1} parent=1 // pred_region
      %2132 = dma.done [#allocation4], 32
    $region45: #{tpu_custom_call.1} parent=1 // pred_fallthru
      _
    // Predicated region
    $region46: #{tpu_custom_call.1} parent=1 // pred_check
      _
    $region47: #{tpu_custom_call.1} parent=1 // pred_check_branch
      %2134 = sbr.rel (0) target = $region49
    $region48: #{tpu_custom_call.1} parent=1 // pred_region
      %2136 = dma.done [#allocation10], 32
    $region49: #{tpu_custom_call.1} parent=1 // pred_fallthru
      _
    // Predicated region
    $region50: #{tpu_custom_call.1} parent=1 // pred_check
      _
    $region51: #{tpu_custom_call.1} parent=1 // pred_check_branch
      %2138 = sbr.rel (0) target = $region53
    $region52: #{tpu_custom_call.1} parent=1 // pred_region
      %2140 = dma.done [#allocation10], 32
    $region53: #{tpu_custom_call.1} parent=1 // pred_fallthru
      _
    %2141 = vsyncpa [#allocation3], 1
    %2142 = vsyncpa [#allocation6], 1
    %2143 = vsyncpa [#allocation4], 1
    %2144 = vsyncpa [#allocation10], 1

</llo_original>
